<compile_context>
chip_gen: v7x
topology: tpu7x:2x2x1
jax: 0.10.0
libtpu: 0.0.40
codegen_flags: <defaults>
</compile_context>

<pallas_src>
import functools

import jax
import jax.numpy as jnp
from jax import lax
from jax.experimental import pallas as pl
from jax.experimental.pallas import tpu as pltpu


def _lstm_tagger_kernel(x_ref, wih_ref, whh_ref, b_ref, wlin_ref, blin_ref,
                        out_ref, *, seq_len, chunk_batch, hidden_dim):
    """LSTM recurrence + linear head + sigmoid for one chunk of sentences.

    Shapes (all float32):
      x_ref   : (1, T*Bc, E)   time-major rows: row t*Bc + b
      wih_ref : (E, 4H)        gate order i|f|g|o (PyTorch), g cols pre-scaled x2
      whh_ref : (H, 4H)        g cols pre-scaled x2
      b_ref   : (1, 4H)        (= b_ih + b_hh, g cols pre-scaled x2)
      wlin_ref: (H, P)         P = TAGS padded to a multiple of 128 (zero cols)
      blin_ref: (1, P)
      out_ref : (1, T*Bc, P)
    """
    T, Bc, H = seq_len, chunk_batch, hidden_dim

    # (1) Hoisted input projection + folded bias: one MXU matmul for all
    #     timesteps of all sentences in this chunk, off the serial path.
    x = x_ref[0]                                                   # (T*Bc, E)
    gx = (jnp.dot(x, wih_ref[...], preferred_element_type=jnp.float32)
          + b_ref[...])                                            # (T*Bc, 4H)

    # (2) Recurrent state lives in vregs (loop-carried values), batched over
    #     the Bc sentences of this chunk. Each sentence starts from zeros,
    #     matching the PyTorch module's init_hidden().
    h = jnp.zeros((Bc, H), jnp.float32)
    c = jnp.zeros((Bc, H), jnp.float32)
    hs = []

    # (3) Fully unrolled time recurrence (T is small & static).
    for t in range(T):
        gates = gx[t * Bc:(t + 1) * Bc, :] + jnp.dot(
            h, whh_ref[...], preferred_element_type=jnp.float32)   # (Bc, 4H)

        # (4) Single full-width EUP push: g-gate columns were pre-scaled by 2
        #     host-side, so tanh(g_pre) == 2*sigmoid(2*g_pre) - 1 only needs a
        #     VPU fixup on the g lanes (no full-width tanh).
        s = jax.nn.sigmoid(gates)
        i_g = s[:, 0:H]
        f_g = s[:, H:2 * H]
        g_g = 2.0 * s[:, 2 * H:3 * H] - 1.0
        o_g = s[:, 3 * H:4 * H]

        c = f_g * c + i_g * g_g
        h = o_g * jnp.tanh(c)            # narrow (Bc, H) EUP push
        hs.append(h)                     # stays in vregs (no scratch store)

    # (5) Hoisted tag head: one matmul over the whole hidden-state history,
    #     one sigmoid, one lane-dense full-block store.
    hs_all = jnp.concatenate(hs, axis=0)                           # (T*Bc, H)
    logits = (jnp.dot(hs_all, wlin_ref[...],
                      preferred_element_type=jnp.float32)
              + blin_ref[...])                                     # (T*Bc, P)
    out_ref[0] = jax.nn.sigmoid(logits).astype(out_ref.dtype)


def lstm_tagger_forward_batch(xs, params, *, num_chunks=None):
    """Run the LSTMTagger forward on a batch of independent sentences.

    xs: (B, T, E) float32; each sentence is run from zero (h0, c0).
    Returns (B, T, TAGS) float32 sigmoid tag scores.
    """
    B, T, E = xs.shape
    H = params["w_hh"].shape[1]
    TAGS = params["w_lin"].shape[0]
    P = ((TAGS + 127) // 128) * 128           # lane-dense padded output width

    if num_chunks is None:
        num_chunks = 2 if (B >= 2 and B % 2 == 0) else 1
    assert B % num_chunks == 0, "batch must divide evenly into chunks"
    Bc = B // num_chunks

    # Host-side weight prep: transpose to (in, out), fold the two biases, and
    # pre-scale the g-gate columns by 2 (tanh-via-sigmoid identity).
    wih_t = params["w_ih"].T                                    # (E, 4H)
    whh_t = params["w_hh"].T                                    # (H, 4H)
    bias = (params["b_ih"] + params["b_hh"]).reshape(1, -1)     # (1, 4H)
    gscale = jnp.concatenate(
        [jnp.ones((1, 2 * H), jnp.float32),
         jnp.full((1, H), 2.0, jnp.float32),
         jnp.ones((1, H), jnp.float32)], axis=1)                # (1, 4H)
    wih_s, whh_s, bias_s = wih_t * gscale, whh_t * gscale, bias * gscale

    wlin_pad = jnp.zeros((H, P), jnp.float32).at[:, :TAGS].set(params["w_lin"].T)
    blin_pad = jnp.zeros((1, P), jnp.float32).at[:, :TAGS].set(
        params["b_lin"].reshape(1, -1))

    # (B, T, E) -> (num_chunks, T*Bc, E), time-major inside each chunk so the
    # per-step gate slice inside the kernel is a contiguous row block.
    x_chunks = (xs.reshape(num_chunks, Bc, T, E)
                  .transpose(0, 2, 1, 3)
                  .reshape(num_chunks, T * Bc, E))

    kernel = functools.partial(_lstm_tagger_kernel,
                               seq_len=T, chunk_batch=Bc, hidden_dim=H)

    out = pl.pallas_call(
        kernel,
        out_shape=jax.ShapeDtypeStruct((num_chunks, T * Bc, P), jnp.float32),
        grid=(num_chunks,),
        in_specs=[
            pl.BlockSpec((1, T * Bc, E), lambda i: (i, 0, 0)),
            pl.BlockSpec((E, 4 * H), lambda i: (0, 0)),
            pl.BlockSpec((H, 4 * H), lambda i: (0, 0)),
            pl.BlockSpec((1, 4 * H), lambda i: (0, 0)),
            pl.BlockSpec((H, P), lambda i: (0, 0)),
            pl.BlockSpec((1, P), lambda i: (0, 0)),
        ],
        out_specs=pl.BlockSpec((1, T * Bc, P), lambda i: (i, 0, 0)),
        compiler_params=pltpu.CompilerParams(
            dimension_semantics=("parallel",)),   # v7x: chunks across both TCs
    )(x_chunks, wih_s, whh_s, bias_s, wlin_pad, blin_pad)

    # (num_chunks, T*Bc, P) -> (B, T, TAGS)
    out = (out.reshape(num_chunks, T, Bc, P)
              .transpose(0, 2, 1, 3)
              .reshape(B, T, P))
    return out[:, :, :TAGS]


def lstm_tagger_forward(x, params):
    """PyTorch-layout entry point: x (T, 1, E) -> (T, 1, TAGS)."""
    T, B, E = x.shape
    assert B == 1, "PyTorch module uses a fixed (1,1,H) hidden state -> batch=1"
    out = lstm_tagger_forward_batch(jnp.transpose(x, (1, 0, 2)), params,
                                    num_chunks=1)
    return jnp.transpose(out, (1, 0, 2))


def init_params(key, embedding_dim, hidden_dim, tagset_size):
    """Deterministic synthetic parameters, PyTorch-style uniform(-k, k)."""
    k = 1.0 / jnp.sqrt(hidden_dim)
    ks = jax.random.split(key, 6)
    u = lambda kk, shape: jax.random.uniform(kk, shape, jnp.float32, -k, k)
    return {
        "w_ih": u(ks[0], (4 * hidden_dim, embedding_dim)),
        "w_hh": u(ks[1], (4 * hidden_dim, hidden_dim)),
        "b_ih": u(ks[2], (4 * hidden_dim,)),
        "b_hh": u(ks[3], (4 * hidden_dim,)),
        "w_lin": u(ks[4], (tagset_size, hidden_dim)),
        "b_lin": u(ks[5], (tagset_size,)),
    }


def _reference_forward(x, params):
    """Pure-JAX reference of the same forward pass (sanity check)."""
    T, B, E = x.shape
    H = params["w_hh"].shape[1]
    wih_t, whh_t = params["w_ih"].T, params["w_hh"].T
    bias = params["b_ih"] + params["b_hh"]

    def step(carry, x_t):
        h, c = carry
        gates = x_t @ wih_t + h @ whh_t + bias
        i = jax.nn.sigmoid(gates[:, 0:H])
        f = jax.nn.sigmoid(gates[:, H:2 * H])
        g = jnp.tanh(gates[:, 2 * H:3 * H])
        o = jax.nn.sigmoid(gates[:, 3 * H:4 * H])
        c = f * c + i * g
        h = o * jnp.tanh(c)
        return (h, c), h

    h0 = jnp.zeros((1, H), jnp.float32)
    c0 = jnp.zeros((1, H), jnp.float32)
    _, hs = lax.scan(step, (h0, c0), x.reshape(T, B, E))
    hs = hs.reshape(T, H)
    tags = jax.nn.sigmoid(hs @ params["w_lin"].T + params["b_lin"])
    return tags.reshape(T, 1, -1)


if __name__ == "__main__":
    EMBEDDING_DIM = 32
    HIDDEN_DIM = 32
    TAGSET_SIZE = 8
    SEQ_LEN = 8
    BATCH = 4          # independent sentences packed into one pallas_call

    key = jax.random.PRNGKey(0)
    k_x, k_p = jax.random.split(key)

    # Batch of pre-embedded "sentences": (batch, seq, embedding_dim)
    xs = jax.random.normal(k_x, (BATCH, SEQ_LEN, EMBEDDING_DIM), jnp.float32)
    params = init_params(k_p, EMBEDDING_DIM, HIDDEN_DIM, TAGSET_SIZE)

    # Batched path: 2 "parallel" grid chunks (both TensorCores on v7x).
    out_b = jax.block_until_ready(
        lstm_tagger_forward_batch(xs, params, num_chunks=2))
    assert out_b.shape == (BATCH, SEQ_LEN, TAGSET_SIZE)

    # PyTorch-layout single-sentence path: (T, 1, E) -> (T, 1, TAGS).
    x0 = xs[0].reshape(SEQ_LEN, 1, EMBEDDING_DIM)
    out_single = jax.block_until_ready(lstm_tagger_forward(x0, params))
    assert out_single.shape == (SEQ_LEN, 1, TAGSET_SIZE)

    # Correctness: each batched sentence must match the per-sentence reference
    # (tolerance covers the tanh-via-sigmoid identity's tiny drift).
    for b in range(BATCH):
        ref_b = _reference_forward(xs[b].reshape(SEQ_LEN, 1, EMBEDDING_DIM),
                                   params)
        assert jnp.allclose(out_b[b].reshape(SEQ_LEN, 1, TAGSET_SIZE), ref_b,
                            atol=2e-5, rtol=2e-5), f"mismatch (sentence {b})"
    assert jnp.allclose(out_single, _reference_forward(x0, params),
                        atol=2e-5, rtol=2e-5), "mismatch (single-sentence path)"

    print("KERNEL_OK")
</pallas_src>

<mosaic_0001>
module attributes {stable_mosaic.version = 11 : i64} {
  func.func @_lstm_tagger_kernel(%arg0: i32, %arg1: memref<1x16x32xf32, #tpu.memory_space<vmem>>, %arg2: memref<32x128xf32, #tpu.memory_space<vmem>>, %arg3: memref<32x128xf32, #tpu.memory_space<vmem>>, %arg4: memref<1x128xf32, #tpu.memory_space<vmem>>, %arg5: memref<32x128xf32, #tpu.memory_space<vmem>>, %arg6: memref<1x128xf32, #tpu.memory_space<vmem>>, %arg7: memref<1x16x128xf32, #tpu.memory_space<vmem>>) attributes {dimension_semantics = [#tpu.dimension_semantics<parallel>], iteration_bounds = array<i64: 2>, scalar_prefetch = 0 : i64, scratch_operands = 0 : i64, tpu.core_type = #tpu.core_type<tc>, window_params = [{transform_indices = @transform_0, window_bounds = array<i64: 1, 16, 32>}, {pipeline_mode = #tpu.pipeline_mode<synchronous>, transform_indices = @transform_1, window_bounds = array<i64: 32, 128>}, {pipeline_mode = #tpu.pipeline_mode<synchronous>, transform_indices = @transform_2, window_bounds = array<i64: 32, 128>}, {pipeline_mode = #tpu.pipeline_mode<synchronous>, transform_indices = @transform_3, window_bounds = array<i64: 1, 128>}, {pipeline_mode = #tpu.pipeline_mode<synchronous>, transform_indices = @transform_4, window_bounds = array<i64: 32, 128>}, {pipeline_mode = #tpu.pipeline_mode<synchronous>, transform_indices = @transform_5, window_bounds = array<i64: 1, 128>}, {transform_indices = @transform_6, window_bounds = array<i64: 1, 16, 128>}]} {
    %c0 = arith.constant 0 : index
    %c0_0 = arith.constant 0 : index
    %c0_1 = arith.constant 0 : index
    %0 = vector.load %arg1[%c0, %c0_0, %c0_1] : memref<1x16x32xf32, #tpu.memory_space<vmem>>, vector<1x16x32xf32>
    %1 = vector.shape_cast %0 : vector<1x16x32xf32> to vector<16x32xf32>
    %c0_2 = arith.constant 0 : index
    %c0_3 = arith.constant 0 : index
    %2 = vector.load %arg2[%c0_2, %c0_3] : memref<32x128xf32, #tpu.memory_space<vmem>>, vector<32x128xf32>
    %cst = arith.constant dense<0.000000e+00> : vector<16x128xf32>
    %3 = tpu.matmul %1, %2, %cst {dimension_numbers = #tpu.dot_dimension_numbers<[1], [0], [0], [1], [0, 0, 1, 1], [], []>} : vector<16x32xf32>, vector<32x128xf32>, vector<16x128xf32> -> vector<16x128xf32>
    %c0_4 = arith.constant 0 : index
    %c0_5 = arith.constant 0 : index
    %4 = vector.load %arg4[%c0_4, %c0_5] : memref<1x128xf32, #tpu.memory_space<vmem>>, vector<1x128xf32>
    %5 = vector.broadcast %4 : vector<1x128xf32> to vector<16x128xf32>
    %6 = arith.addf %3, %5 : vector<16x128xf32>
    %cst_6 = arith.constant 0.000000e+00 : f32
    %7 = vector.broadcast %cst_6 : f32 to vector<2x32xf32>
    %cst_7 = arith.constant 0.000000e+00 : f32
    %8 = vector.broadcast %cst_7 : f32 to vector<2x32xf32>
    %9 = vector.extract_strided_slice %6 {offsets = [0, 0], sizes = [2, 128], strides = [1, 1]} : vector<16x128xf32> to vector<2x128xf32>
    %c0_8 = arith.constant 0 : index
    %c0_9 = arith.constant 0 : index
    %10 = vector.load %arg3[%c0_8, %c0_9] : memref<32x128xf32, #tpu.memory_space<vmem>>, vector<32x128xf32>
    %cst_10 = arith.constant dense<0.000000e+00> : vector<2x128xf32>
    %11 = tpu.matmul %7, %10, %cst_10 {dimension_numbers = #tpu.dot_dimension_numbers<[1], [0], [0], [1], [0, 0, 1, 1], [], []>} : vector<2x32xf32>, vector<32x128xf32>, vector<2x128xf32> -> vector<2x128xf32>
    %12 = arith.addf %9, %11 : vector<2x128xf32>
    %13 = arith.negf %12 : vector<2x128xf32>
    %14 = math.exp %13 : vector<2x128xf32>
    %cst_11 = arith.constant 1.000000e+00 : f32
    %15 = vector.broadcast %cst_11 : f32 to vector<2x128xf32>
    %16 = arith.addf %15, %14 : vector<2x128xf32>
    %17 = arith.divf %15, %16 : vector<2x128xf32>
    %18 = vector.extract_strided_slice %17 {offsets = [0, 0], sizes = [2, 32], strides = [1, 1]} : vector<2x128xf32> to vector<2x32xf32>
    %19 = vector.extract_strided_slice %17 {offsets = [0, 32], sizes = [2, 32], strides = [1, 1]} : vector<2x128xf32> to vector<2x32xf32>
    %20 = vector.extract_strided_slice %17 {offsets = [0, 64], sizes = [2, 32], strides = [1, 1]} : vector<2x128xf32> to vector<2x32xf32>
    %cst_12 = arith.constant 2.000000e+00 : f32
    %21 = vector.broadcast %cst_12 : f32 to vector<2x32xf32>
    %22 = arith.mulf %21, %20 : vector<2x32xf32>
    %cst_13 = arith.constant 1.000000e+00 : f32
    %23 = vector.broadcast %cst_13 : f32 to vector<2x32xf32>
    %24 = arith.subf %22, %23 : vector<2x32xf32>
    %25 = vector.extract_strided_slice %17 {offsets = [0, 96], sizes = [2, 32], strides = [1, 1]} : vector<2x128xf32> to vector<2x32xf32>
    %26 = arith.mulf %19, %8 : vector<2x32xf32>
    %27 = arith.mulf %18, %24 : vector<2x32xf32>
    %28 = arith.addf %26, %27 : vector<2x32xf32>
    %29 = math.tanh %28 : vector<2x32xf32>
    %30 = arith.mulf %25, %29 : vector<2x32xf32>
    %31 = vector.extract_strided_slice %6 {offsets = [2, 0], sizes = [2, 128], strides = [1, 1]} : vector<16x128xf32> to vector<2x128xf32>
    %c0_14 = arith.constant 0 : index
    %c0_15 = arith.constant 0 : index
    %32 = vector.load %arg3[%c0_14, %c0_15] : memref<32x128xf32, #tpu.memory_space<vmem>>, vector<32x128xf32>
    %cst_16 = arith.constant dense<0.000000e+00> : vector<2x128xf32>
    %33 = tpu.matmul %30, %32, %cst_16 {dimension_numbers = #tpu.dot_dimension_numbers<[1], [0], [0], [1], [0, 0, 1, 1], [], []>} : vector<2x32xf32>, vector<32x128xf32>, vector<2x128xf32> -> vector<2x128xf32>
    %34 = arith.addf %31, %33 : vector<2x128xf32>
    %35 = arith.negf %34 : vector<2x128xf32>
    %36 = math.exp %35 : vector<2x128xf32>
    %cst_17 = arith.constant 1.000000e+00 : f32
    %37 = vector.broadcast %cst_17 : f32 to vector<2x128xf32>
    %38 = arith.addf %37, %36 : vector<2x128xf32>
    %39 = arith.divf %37, %38 : vector<2x128xf32>
    %40 = vector.extract_strided_slice %39 {offsets = [0, 0], sizes = [2, 32], strides = [1, 1]} : vector<2x128xf32> to vector<2x32xf32>
    %41 = vector.extract_strided_slice %39 {offsets = [0, 32], sizes = [2, 32], strides = [1, 1]} : vector<2x128xf32> to vector<2x32xf32>
    %42 = vector.extract_strided_slice %39 {offsets = [0, 64], sizes = [2, 32], strides = [1, 1]} : vector<2x128xf32> to vector<2x32xf32>
    %cst_18 = arith.constant 2.000000e+00 : f32
    %43 = vector.broadcast %cst_18 : f32 to vector<2x32xf32>
    %44 = arith.mulf %43, %42 : vector<2x32xf32>
    %cst_19 = arith.constant 1.000000e+00 : f32
    %45 = vector.broadcast %cst_19 : f32 to vector<2x32xf32>
    %46 = arith.subf %44, %45 : vector<2x32xf32>
    %47 = vector.extract_strided_slice %39 {offsets = [0, 96], sizes = [2, 32], strides = [1, 1]} : vector<2x128xf32> to vector<2x32xf32>
    %48 = arith.mulf %41, %28 : vector<2x32xf32>
    %49 = arith.mulf %40, %46 : vector<2x32xf32>
    %50 = arith.addf %48, %49 : vector<2x32xf32>
    %51 = math.tanh %50 : vector<2x32xf32>
    %52 = arith.mulf %47, %51 : vector<2x32xf32>
    %53 = vector.extract_strided_slice %6 {offsets = [4, 0], sizes = [2, 128], strides = [1, 1]} : vector<16x128xf32> to vector<2x128xf32>
    %c0_20 = arith.constant 0 : index
    %c0_21 = arith.constant 0 : index
    %54 = vector.load %arg3[%c0_20, %c0_21] : memref<32x128xf32, #tpu.memory_space<vmem>>, vector<32x128xf32>
    %cst_22 = arith.constant dense<0.000000e+00> : vector<2x128xf32>
    %55 = tpu.matmul %52, %54, %cst_22 {dimension_numbers = #tpu.dot_dimension_numbers<[1], [0], [0], [1], [0, 0, 1, 1], [], []>} : vector<2x32xf32>, vector<32x128xf32>, vector<2x128xf32> -> vector<2x128xf32>
    %56 = arith.addf %53, %55 : vector<2x128xf32>
    %57 = arith.negf %56 : vector<2x128xf32>
    %58 = math.exp %57 : vector<2x128xf32>
    %cst_23 = arith.constant 1.000000e+00 : f32
    %59 = vector.broadcast %cst_23 : f32 to vector<2x128xf32>
    %60 = arith.addf %59, %58 : vector<2x128xf32>
    %61 = arith.divf %59, %60 : vector<2x128xf32>
    %62 = vector.extract_strided_slice %61 {offsets = [0, 0], sizes = [2, 32], strides = [1, 1]} : vector<2x128xf32> to vector<2x32xf32>
    %63 = vector.extract_strided_slice %61 {offsets = [0, 32], sizes = [2, 32], strides = [1, 1]} : vector<2x128xf32> to vector<2x32xf32>
    %64 = vector.extract_strided_slice %61 {offsets = [0, 64], sizes = [2, 32], strides = [1, 1]} : vector<2x128xf32> to vector<2x32xf32>
    %cst_24 = arith.constant 2.000000e+00 : f32
    %65 = vector.broadcast %cst_24 : f32 to vector<2x32xf32>
    %66 = arith.mulf %65, %64 : vector<2x32xf32>
    %cst_25 = arith.constant 1.000000e+00 : f32
    %67 = vector.broadcast %cst_25 : f32 to vector<2x32xf32>
    %68 = arith.subf %66, %67 : vector<2x32xf32>
    %69 = vector.extract_strided_slice %61 {offsets = [0, 96], sizes = [2, 32], strides = [1, 1]} : vector<2x128xf32> to vector<2x32xf32>
    %70 = arith.mulf %63, %50 : vector<2x32xf32>
    %71 = arith.mulf %62, %68 : vector<2x32xf32>
    %72 = arith.addf %70, %71 : vector<2x32xf32>
    %73 = math.tanh %72 : vector<2x32xf32>
    %74 = arith.mulf %69, %73 : vector<2x32xf32>
    %75 = vector.extract_strided_slice %6 {offsets = [6, 0], sizes = [2, 128], strides = [1, 1]} : vector<16x128xf32> to vector<2x128xf32>
    %c0_26 = arith.constant 0 : index
    %c0_27 = arith.constant 0 : index
    %76 = vector.load %arg3[%c0_26, %c0_27] : memref<32x128xf32, #tpu.memory_space<vmem>>, vector<32x128xf32>
    %cst_28 = arith.constant dense<0.000000e+00> : vector<2x128xf32>
    %77 = tpu.matmul %74, %76, %cst_28 {dimension_numbers = #tpu.dot_dimension_numbers<[1], [0], [0], [1], [0, 0, 1, 1], [], []>} : vector<2x32xf32>, vector<32x128xf32>, vector<2x128xf32> -> vector<2x128xf32>
    %78 = arith.addf %75, %77 : vector<2x128xf32>
    %79 = arith.negf %78 : vector<2x128xf32>
    %80 = math.exp %79 : vector<2x128xf32>
    %cst_29 = arith.constant 1.000000e+00 : f32
    %81 = vector.broadcast %cst_29 : f32 to vector<2x128xf32>
    %82 = arith.addf %81, %80 : vector<2x128xf32>
    %83 = arith.divf %81, %82 : vector<2x128xf32>
    %84 = vector.extract_strided_slice %83 {offsets = [0, 0], sizes = [2, 32], strides = [1, 1]} : vector<2x128xf32> to vector<2x32xf32>
    %85 = vector.extract_strided_slice %83 {offsets = [0, 32], sizes = [2, 32], strides = [1, 1]} : vector<2x128xf32> to vector<2x32xf32>
    %86 = vector.extract_strided_slice %83 {offsets = [0, 64], sizes = [2, 32], strides = [1, 1]} : vector<2x128xf32> to vector<2x32xf32>
    %cst_30 = arith.constant 2.000000e+00 : f32
    %87 = vector.broadcast %cst_30 : f32 to vector<2x32xf32>
    %88 = arith.mulf %87, %86 : vector<2x32xf32>
    %cst_31 = arith.constant 1.000000e+00 : f32
    %89 = vector.broadcast %cst_31 : f32 to vector<2x32xf32>
    %90 = arith.subf %88, %89 : vector<2x32xf32>
    %91 = vector.extract_strided_slice %83 {offsets = [0, 96], sizes = [2, 32], strides = [1, 1]} : vector<2x128xf32> to vector<2x32xf32>
    %92 = arith.mulf %85, %72 : vector<2x32xf32>
    %93 = arith.mulf %84, %90 : vector<2x32xf32>
    %94 = arith.addf %92, %93 : vector<2x32xf32>
    %95 = math.tanh %94 : vector<2x32xf32>
    %96 = arith.mulf %91, %95 : vector<2x32xf32>
    %97 = vector.extract_strided_slice %6 {offsets = [8, 0], sizes = [2, 128], strides = [1, 1]} : vector<16x128xf32> to vector<2x128xf32>
    %c0_32 = arith.constant 0 : index
    %c0_33 = arith.constant 0 : index
    %98 = vector.load %arg3[%c0_32, %c0_33] : memref<32x128xf32, #tpu.memory_space<vmem>>, vector<32x128xf32>
    %cst_34 = arith.constant dense<0.000000e+00> : vector<2x128xf32>
    %99 = tpu.matmul %96, %98, %cst_34 {dimension_numbers = #tpu.dot_dimension_numbers<[1], [0], [0], [1], [0, 0, 1, 1], [], []>} : vector<2x32xf32>, vector<32x128xf32>, vector<2x128xf32> -> vector<2x128xf32>
    %100 = arith.addf %97, %99 : vector<2x128xf32>
    %101 = arith.negf %100 : vector<2x128xf32>
    %102 = math.exp %101 : vector<2x128xf32>
    %cst_35 = arith.constant 1.000000e+00 : f32
    %103 = vector.broadcast %cst_35 : f32 to vector<2x128xf32>
    %104 = arith.addf %103, %102 : vector<2x128xf32>
    %105 = arith.divf %103, %104 : vector<2x128xf32>
    %106 = vector.extract_strided_slice %105 {offsets = [0, 0], sizes = [2, 32], strides = [1, 1]} : vector<2x128xf32> to vector<2x32xf32>
    %107 = vector.extract_strided_slice %105 {offsets = [0, 32], sizes = [2, 32], strides = [1, 1]} : vector<2x128xf32> to vector<2x32xf32>
    %108 = vector.extract_strided_slice %105 {offsets = [0, 64], sizes = [2, 32], strides = [1, 1]} : vector<2x128xf32> to vector<2x32xf32>
    %cst_36 = arith.constant 2.000000e+00 : f32
    %109 = vector.broadcast %cst_36 : f32 to vector<2x32xf32>
    %110 = arith.mulf %109, %108 : vector<2x32xf32>
    %cst_37 = arith.constant 1.000000e+00 : f32
    %111 = vector.broadcast %cst_37 : f32 to vector<2x32xf32>
    %112 = arith.subf %110, %111 : vector<2x32xf32>
    %113 = vector.extract_strided_slice %105 {offsets = [0, 96], sizes = [2, 32], strides = [1, 1]} : vector<2x128xf32> to vector<2x32xf32>
    %114 = arith.mulf %107, %94 : vector<2x32xf32>
    %115 = arith.mulf %106, %112 : vector<2x32xf32>
    %116 = arith.addf %114, %115 : vector<2x32xf32>
    %117 = math.tanh %116 : vector<2x32xf32>
    %118 = arith.mulf %113, %117 : vector<2x32xf32>
    %119 = vector.extract_strided_slice %6 {offsets = [10, 0], sizes = [2, 128], strides = [1, 1]} : vector<16x128xf32> to vector<2x128xf32>
    %c0_38 = arith.constant 0 : index
    %c0_39 = arith.constant 0 : index
    %120 = vector.load %arg3[%c0_38, %c0_39] : memref<32x128xf32, #tpu.memory_space<vmem>>, vector<32x128xf32>
    %cst_40 = arith.constant dense<0.000000e+00> : vector<2x128xf32>
    %121 = tpu.matmul %118, %120, %cst_40 {dimension_numbers = #tpu.dot_dimension_numbers<[1], [0], [0], [1], [0, 0, 1, 1], [], []>} : vector<2x32xf32>, vector<32x128xf32>, vector<2x128xf32> -> vector<2x128xf32>
    %122 = arith.addf %119, %121 : vector<2x128xf32>
    %123 = arith.negf %122 : vector<2x128xf32>
    %124 = math.exp %123 : vector<2x128xf32>
    %cst_41 = arith.constant 1.000000e+00 : f32
    %125 = vector.broadcast %cst_41 : f32 to vector<2x128xf32>
    %126 = arith.addf %125, %124 : vector<2x128xf32>
    %127 = arith.divf %125, %126 : vector<2x128xf32>
    %128 = vector.extract_strided_slice %127 {offsets = [0, 0], sizes = [2, 32], strides = [1, 1]} : vector<2x128xf32> to vector<2x32xf32>
    %129 = vector.extract_strided_slice %127 {offsets = [0, 32], sizes = [2, 32], strides = [1, 1]} : vector<2x128xf32> to vector<2x32xf32>
    %130 = vector.extract_strided_slice %127 {offsets = [0, 64], sizes = [2, 32], strides = [1, 1]} : vector<2x128xf32> to vector<2x32xf32>
    %cst_42 = arith.constant 2.000000e+00 : f32
    %131 = vector.broadcast %cst_42 : f32 to vector<2x32xf32>
    %132 = arith.mulf %131, %130 : vector<2x32xf32>
    %cst_43 = arith.constant 1.000000e+00 : f32
    %133 = vector.broadcast %cst_43 : f32 to vector<2x32xf32>
    %134 = arith.subf %132, %133 : vector<2x32xf32>
    %135 = vector.extract_strided_slice %127 {offsets = [0, 96], sizes = [2, 32], strides = [1, 1]} : vector<2x128xf32> to vector<2x32xf32>
    %136 = arith.mulf %129, %116 : vector<2x32xf32>
    %137 = arith.mulf %128, %134 : vector<2x32xf32>
    %138 = arith.addf %136, %137 : vector<2x32xf32>
    %139 = math.tanh %138 : vector<2x32xf32>
    %140 = arith.mulf %135, %139 : vector<2x32xf32>
    %141 = vector.extract_strided_slice %6 {offsets = [12, 0], sizes = [2, 128], strides = [1, 1]} : vector<16x128xf32> to vector<2x128xf32>
    %c0_44 = arith.constant 0 : index
    %c0_45 = arith.constant 0 : index
    %142 = vector.load %arg3[%c0_44, %c0_45] : memref<32x128xf32, #tpu.memory_space<vmem>>, vector<32x128xf32>
    %cst_46 = arith.constant dense<0.000000e+00> : vector<2x128xf32>
    %143 = tpu.matmul %140, %142, %cst_46 {dimension_numbers = #tpu.dot_dimension_numbers<[1], [0], [0], [1], [0, 0, 1, 1], [], []>} : vector<2x32xf32>, vector<32x128xf32>, vector<2x128xf32> -> vector<2x128xf32>
    %144 = arith.addf %141, %143 : vector<2x128xf32>
    %145 = arith.negf %144 : vector<2x128xf32>
    %146 = math.exp %145 : vector<2x128xf32>
    %cst_47 = arith.constant 1.000000e+00 : f32
    %147 = vector.broadcast %cst_47 : f32 to vector<2x128xf32>
    %148 = arith.addf %147, %146 : vector<2x128xf32>
    %149 = arith.divf %147, %148 : vector<2x128xf32>
    %150 = vector.extract_strided_slice %149 {offsets = [0, 0], sizes = [2, 32], strides = [1, 1]} : vector<2x128xf32> to vector<2x32xf32>
    %151 = vector.extract_strided_slice %149 {offsets = [0, 32], sizes = [2, 32], strides = [1, 1]} : vector<2x128xf32> to vector<2x32xf32>
    %152 = vector.extract_strided_slice %149 {offsets = [0, 64], sizes = [2, 32], strides = [1, 1]} : vector<2x128xf32> to vector<2x32xf32>
    %cst_48 = arith.constant 2.000000e+00 : f32
    %153 = vector.broadcast %cst_48 : f32 to vector<2x32xf32>
    %154 = arith.mulf %153, %152 : vector<2x32xf32>
    %cst_49 = arith.constant 1.000000e+00 : f32
    %155 = vector.broadcast %cst_49 : f32 to vector<2x32xf32>
    %156 = arith.subf %154, %155 : vector<2x32xf32>
    %157 = vector.extract_strided_slice %149 {offsets = [0, 96], sizes = [2, 32], strides = [1, 1]} : vector<2x128xf32> to vector<2x32xf32>
    %158 = arith.mulf %151, %138 : vector<2x32xf32>
    %159 = arith.mulf %150, %156 : vector<2x32xf32>
    %160 = arith.addf %158, %159 : vector<2x32xf32>
    %161 = math.tanh %160 : vector<2x32xf32>
    %162 = arith.mulf %157, %161 : vector<2x32xf32>
    %163 = vector.extract_strided_slice %6 {offsets = [14, 0], sizes = [2, 128], strides = [1, 1]} : vector<16x128xf32> to vector<2x128xf32>
    %c0_50 = arith.constant 0 : index
    %c0_51 = arith.constant 0 : index
    %164 = vector.load %arg3[%c0_50, %c0_51] : memref<32x128xf32, #tpu.memory_space<vmem>>, vector<32x128xf32>
    %cst_52 = arith.constant dense<0.000000e+00> : vector<2x128xf32>
    %165 = tpu.matmul %162, %164, %cst_52 {dimension_numbers = #tpu.dot_dimension_numbers<[1], [0], [0], [1], [0, 0, 1, 1], [], []>} : vector<2x32xf32>, vector<32x128xf32>, vector<2x128xf32> -> vector<2x128xf32>
    %166 = arith.addf %163, %165 : vector<2x128xf32>
    %167 = arith.negf %166 : vector<2x128xf32>
    %168 = math.exp %167 : vector<2x128xf32>
    %cst_53 = arith.constant 1.000000e+00 : f32
    %169 = vector.broadcast %cst_53 : f32 to vector<2x128xf32>
    %170 = arith.addf %169, %168 : vector<2x128xf32>
    %171 = arith.divf %169, %170 : vector<2x128xf32>
    %172 = vector.extract_strided_slice %171 {offsets = [0, 0], sizes = [2, 32], strides = [1, 1]} : vector<2x128xf32> to vector<2x32xf32>
    %173 = vector.extract_strided_slice %171 {offsets = [0, 32], sizes = [2, 32], strides = [1, 1]} : vector<2x128xf32> to vector<2x32xf32>
    %174 = vector.extract_strided_slice %171 {offsets = [0, 64], sizes = [2, 32], strides = [1, 1]} : vector<2x128xf32> to vector<2x32xf32>
    %cst_54 = arith.constant 2.000000e+00 : f32
    %175 = vector.broadcast %cst_54 : f32 to vector<2x32xf32>
    %176 = arith.mulf %175, %174 : vector<2x32xf32>
    %cst_55 = arith.constant 1.000000e+00 : f32
    %177 = vector.broadcast %cst_55 : f32 to vector<2x32xf32>
    %178 = arith.subf %176, %177 : vector<2x32xf32>
    %179 = vector.extract_strided_slice %171 {offsets = [0, 96], sizes = [2, 32], strides = [1, 1]} : vector<2x128xf32> to vector<2x32xf32>
    %180 = arith.mulf %173, %160 : vector<2x32xf32>
    %181 = arith.mulf %172, %178 : vector<2x32xf32>
    %182 = arith.addf %180, %181 : vector<2x32xf32>
    %183 = math.tanh %182 : vector<2x32xf32>
    %184 = arith.mulf %179, %183 : vector<2x32xf32>
    %185 = tpu.concatenate %30, %52, %74, %96, %118, %140, %162, %184 in 0 : vector<2x32xf32>, vector<2x32xf32>, vector<2x32xf32>, vector<2x32xf32>, vector<2x32xf32>, vector<2x32xf32>, vector<2x32xf32>, vector<2x32xf32> -> vector<16x32xf32>
    %c0_56 = arith.constant 0 : index
    %c0_57 = arith.constant 0 : index
    %186 = vector.load %arg5[%c0_56, %c0_57] : memref<32x128xf32, #tpu.memory_space<vmem>>, vector<32x128xf32>
    %cst_58 = arith.constant dense<0.000000e+00> : vector<16x128xf32>
    %187 = tpu.matmul %185, %186, %cst_58 {dimension_numbers = #tpu.dot_dimension_numbers<[1], [0], [0], [1], [0, 0, 1, 1], [], []>} : vector<16x32xf32>, vector<32x128xf32>, vector<16x128xf32> -> vector<16x128xf32>
    %c0_59 = arith.constant 0 : index
    %c0_60 = arith.constant 0 : index
    %188 = vector.load %arg6[%c0_59, %c0_60] : memref<1x128xf32, #tpu.memory_space<vmem>>, vector<1x128xf32>
    %189 = vector.broadcast %188 : vector<1x128xf32> to vector<16x128xf32>
    %190 = arith.addf %187, %189 : vector<16x128xf32>
    %191 = arith.negf %190 : vector<16x128xf32>
    %192 = math.exp %191 : vector<16x128xf32>
    %cst_61 = arith.constant 1.000000e+00 : f32
    %193 = vector.broadcast %cst_61 : f32 to vector<16x128xf32>
    %194 = arith.addf %193, %192 : vector<16x128xf32>
    %195 = arith.divf %193, %194 : vector<16x128xf32>
    %c0_62 = arith.constant 0 : index
    %c0_63 = arith.constant 0 : index
    %c0_64 = arith.constant 0 : index
    %196 = vector.load %arg7[%c0_62, %c0_63, %c0_64] : memref<1x16x128xf32, #tpu.memory_space<vmem>>, vector<1x16x128xf32>
    %197 = vector.shape_cast %196 : vector<1x16x128xf32> to vector<16x128xf32>
    %198 = vector.shape_cast %195 : vector<16x128xf32> to vector<1x16x128xf32>
    tpu.vector_store %arg7[%c0_62, %c0_63, %c0_64], %198 {strides = array<i32>} : memref<1x16x128xf32, #tpu.memory_space<vmem>>, vector<1x16x128xf32>,
    return
  }
  func.func @transform_0(%arg0: i32) -> (i32, i32, i32) {
    %c0_i32 = arith.constant 0 : i32
    %c0_i32_0 = arith.constant 0 : i32
    %c0_i32_1 = arith.constant 0 : i32
    return %arg0, %c0_i32, %c0_i32_0 : i32, i32, i32
  }
  func.func @transform_1(%arg0: i32) -> (i32, i32) {
    %c0_i32 = arith.constant 0 : i32
    %c0_i32_0 = arith.constant 0 : i32
    %c0_i32_1 = arith.constant 0 : i32
    return %c0_i32, %c0_i32_0 : i32, i32
  }
  func.func @transform_2(%arg0: i32) -> (i32, i32) {
    %c0_i32 = arith.constant 0 : i32
    %c0_i32_0 = arith.constant 0 : i32
    %c0_i32_1 = arith.constant 0 : i32
    return %c0_i32, %c0_i32_0 : i32, i32
  }
  func.func @transform_3(%arg0: i32) -> (i32, i32) {
    %c0_i32 = arith.constant 0 : i32
    %c0_i32_0 = arith.constant 0 : i32
    %c0_i32_1 = arith.constant 0 : i32
    return %c0_i32, %c0_i32_0 : i32, i32
  }
  func.func @transform_4(%arg0: i32) -> (i32, i32) {
    %c0_i32 = arith.constant 0 : i32
    %c0_i32_0 = arith.constant 0 : i32
    %c0_i32_1 = arith.constant 0 : i32
    return %c0_i32, %c0_i32_0 : i32, i32
  }
  func.func @transform_5(%arg0: i32) -> (i32, i32) {
    %c0_i32 = arith.constant 0 : i32
    %c0_i32_0 = arith.constant 0 : i32
    %c0_i32_1 = arith.constant 0 : i32
    return %c0_i32, %c0_i32_0 : i32, i32
  }
  func.func @transform_6(%arg0: i32) -> (i32, i32, i32) {
    %c0_i32 = arith.constant 0 : i32
    %c0_i32_0 = arith.constant 0 : i32
    %c0_i32_1 = arith.constant 0 : i32
    return %arg0, %c0_i32, %c0_i32_0 : i32, i32, i32
  }
}

</mosaic_0001>

<llo_original>
// kernel: tpu_custom_call.1
$region0: #{tpu_custom_call.1}
  #allocation0 [shape = 'u32[]', space=smem, size = 0x4, offset = 0x4, fixed_abs, tag = 'smem constant byte address 0x4 - core index']
  #allocation1 [shape = 'u32[144,128]{1,0:T(1,128)}', space=vmem, size = 0x12000, scoped, tag = 'internal scratch']
  %s0 = inlined_call_operand.hbm [shape: f32[2,16,32], index: 0, kind: input, shape index: {}]
  %s1 = inlined_call_operand.hbm [shape: f32[32,128], index: 1, kind: input, shape index: {}]
  %s2 = inlined_call_operand.hbm [shape: f32[32,128], index: 2, kind: input, shape index: {}]
  %s3 = inlined_call_operand.vmem [shape: f32[1,128], index: 3, kind: input, shape index: {}]
  %s4 = inlined_call_operand.hbm [shape: f32[32,128], index: 4, kind: input, shape index: {}]
  %s5 = inlined_call_operand.vmem [shape: f32[1,128], index: 5, kind: input, shape index: {}]
  %s6 = inlined_call_operand.hbm [shape: f32[2,16,128], index: 6, kind: output, shape index: {}]
  %s7 = sld [smem:[#allocation0]]
  $region73: #{tpu_custom_call.1} parent=0
    _
  %s9 = ssub.s32 1, %s7
  %s10 = scalar_select 0, %s9, %s7
  $region1: #{tpu_custom_call.1} parent=0
    #allocation2 [shape = 'u8[16384]{0}', space=vmem, size = 0x4000, scoped, tag = 'input window, operand 0']
    #allocation3 [shape = 's32[2]{0}', space=sflag, size = 0x8, scoped, tag = 'scoped memory for tpu_custom_call.1']
    #allocation4 [shape = 's32[2]{0}', space=sflag, size = 0x8, scoped, tag = 'scoped memory for tpu_custom_call.1']
    #allocation5 [shape = 'u8[16384]{0}', space=vmem, size = 0x4000, scoped, tag = 'input window, operand 1, single buffered']
    #allocation6 [shape = 's32[1]{0}', space=sflag, size = 0x4, scoped, tag = 'scoped memory for tpu_custom_call.1']
    #allocation7 [shape = 'u8[16384]{0}', space=vmem, size = 0x4000, scoped, tag = 'input window, operand 2, single buffered']
    #allocation8 [shape = 'u8[16384]{0}', space=vmem, size = 0x4000, scoped, tag = 'input window, operand 4, single buffered']
    #allocation9 [shape = 's32[1]{0}', space=sflag, size = 0x4, scoped, tag = 'scoped memory for tpu_custom_call.1']
    #allocation10 [shape = 'u8[16384]{0}', space=vmem, size = 0x4000, scoped, tag = 'output window, operand 0']
    %11 = vsyncpa [#allocation3], 0
    %s12 = scalar_lea.sflag [#allocation3], 1
    %13 = vsyncpa %s12, 0
    %14 = vsyncpa [#allocation6], 0
    %15 = vsyncpa [#allocation9], 0
    %16 = vsyncpa [#allocation4], 0
    %s17 = scalar_lea.sflag [#allocation4], 1
    %18 = vsyncpa %s17, 0
    loop: start=0, step=1, limit=4
    $region2: #{tpu_custom_call.1} parent=1 // loop_pre_header
      _
    $region3: #{tpu_custom_call.1} parent=1 // loop_header
      %s20 = sphi 0, %s24
      %p21 = scmp.ge.s32.totalorder %s20, 4
      %s30 = sphi 0, %s32
      %s33 = sphi 0, %s30
      %s34 = sphi 0, %s33
      %s50 = sphi 0, %s34
      %s54 = sphi 0, %s54
      %s56 = sphi 0, %s54
      %s57 = sphi 0, %s56
      %s71 = sphi 0, %s57
      %s75 = sphi 0, %s75
      %s77 = sphi 0, %s75
      %s78 = sphi 0, %s77
      %s92 = sphi 0, %s78
      %s96 = sphi 0, %s96
      %s98 = sphi 0, %s96
      %s99 = sphi 0, %s98
      %s113 = sphi 0, %s99
      %s117 = sphi 0, %s117
      %s119 = sphi 0, %s117
      %s120 = sphi 0, %s119
      %s134 = sphi 0, %s120
      %s138 = sphi 0, %s138
      %s140 = sphi 0, %s138
      %s141 = sphi 0, %s140
      %s155 = sphi 0, %s141
      %s161 = sphi 0, %s163
      %s164 = sphi 0, %s161
      %s165 = sphi 0, %s164
      %s181 = sphi 0, %s165
    $region4: #{tpu_custom_call.1} parent=1 // loop_header_branch
      %23 = sbr.rel (%p21) target = $region8
    $region5: #{tpu_custom_call.1} parent=1 // loop_body
      %s25 = ssub.s32 %s20, 1
      %s26 = ssub.s32 %s20, 2
      %s27 = sadd.s32 %s20, 1
      %s28 = ssub.s32 %s20, %s27
      %p29 = scmp.eq.s32.totalorder %s28, 0
      %s31 = sadd.s32 %s30, 1
      %s32 = scalar_select %p29, %s30, %s31
      %p35 = pneg %p29
      %p36 = scmp.eq.s32.totalorder %s20, 1
      %p37 = por %p35, %p36
      %p38 = scmp.ne.s32.totalorder %s30, %s33
      %p39 = scmp.eq.s32.totalorder %s20, 0
      %p40 = por %p38, %p39
      %p41 = scmp.ne.s32.totalorder %s30, %s33
      %p42 = scmp.eq.s32.totalorder %s25, 1
      %p43 = por %p41, %p42
      %p44 = scmp.ne.s32.totalorder %s33, %s34
      %p45 = scmp.eq.s32.totalorder %s25, 0
      %p46 = por %p44, %p45
      %p47 = scmp.ne.s32.totalorder %s33, %s34
      %p48 = scmp.eq.s32.totalorder %s26, 1
      %p49 = por %p47, %p48
      %p51 = scmp.ne.s32.totalorder %s34, %s50
      %p52 = scmp.eq.s32.totalorder %s26, 0
      %p53 = por %p51, %p52
      %s55 = sadd.s32 %s54, 1
      %p58 = scmp.eq.s32.totalorder %s20, 1
      %p59 = scmp.ne.s32.totalorder %s54, %s56
      %p60 = scmp.eq.s32.totalorder %s20, 0
      %p61 = por %p59, %p60
      %p62 = scmp.ne.s32.totalorder %s54, %s56
      %p63 = scmp.eq.s32.totalorder %s25, 1
      %p64 = por %p62, %p63
      %p65 = scmp.ne.s32.totalorder %s56, %s57
      %p66 = scmp.eq.s32.totalorder %s25, 0
      %p67 = por %p65, %p66
      %p68 = scmp.ne.s32.totalorder %s56, %s57
      %p69 = scmp.eq.s32.totalorder %s26, 1
      %p70 = por %p68, %p69
      %p72 = scmp.ne.s32.totalorder %s57, %s71
      %p73 = scmp.eq.s32.totalorder %s26, 0
      %p74 = por %p72, %p73
      %s76 = sadd.s32 %s75, 1
      %p79 = scmp.eq.s32.totalorder %s20, 1
      %p80 = scmp.ne.s32.totalorder %s75, %s77
      %p81 = scmp.eq.s32.totalorder %s20, 0
      %p82 = por %p80, %p81
      %p83 = scmp.ne.s32.totalorder %s75, %s77
      %p84 = scmp.eq.s32.totalorder %s25, 1
      %p85 = por %p83, %p84
      %p86 = scmp.ne.s32.totalorder %s77, %s78
      %p87 = scmp.eq.s32.totalorder %s25, 0
      %p88 = por %p86, %p87
      %p89 = scmp.ne.s32.totalorder %s77, %s78
      %p90 = scmp.eq.s32.totalorder %s26, 1
      %p91 = por %p89, %p90
      %p93 = scmp.ne.s32.totalorder %s78, %s92
      %p94 = scmp.eq.s32.totalorder %s26, 0
      %p95 = por %p93, %p94
      %s97 = sadd.s32 %s96, 1
      %p100 = scmp.eq.s32.totalorder %s20, 1
      %p101 = scmp.ne.s32.totalorder %s96, %s98
      %p102 = scmp.eq.s32.totalorder %s20, 0
      %p103 = por %p101, %p102
      %p104 = scmp.ne.s32.totalorder %s96, %s98
      %p105 = scmp.eq.s32.totalorder %s25, 1
      %p106 = por %p104, %p105
      %p107 = scmp.ne.s32.totalorder %s98, %s99
      %p108 = scmp.eq.s32.totalorder %s25, 0
      %p109 = por %p107, %p108
      %p110 = scmp.ne.s32.totalorder %s98, %s99
      %p111 = scmp.eq.s32.totalorder %s26, 1
      %p112 = por %p110, %p111
      %p114 = scmp.ne.s32.totalorder %s99, %s113
      %p115 = scmp.eq.s32.totalorder %s26, 0
      %p116 = por %p114, %p115
      %s118 = sadd.s32 %s117, 1
      %p121 = scmp.eq.s32.totalorder %s20, 1
      %p122 = scmp.ne.s32.totalorder %s117, %s119
      %p123 = scmp.eq.s32.totalorder %s20, 0
      %p124 = por %p122, %p123
      %p125 = scmp.ne.s32.totalorder %s117, %s119
      %p126 = scmp.eq.s32.totalorder %s25, 1
      %p127 = por %p125, %p126
      %p128 = scmp.ne.s32.totalorder %s119, %s120
      %p129 = scmp.eq.s32.totalorder %s25, 0
      %p130 = por %p128, %p129
      %p131 = scmp.ne.s32.totalorder %s119, %s120
      %p132 = scmp.eq.s32.totalorder %s26, 1
      %p133 = por %p131, %p132
      %p135 = scmp.ne.s32.totalorder %s120, %s134
      %p136 = scmp.eq.s32.totalorder %s26, 0
      %p137 = por %p135, %p136
      %s139 = sadd.s32 %s138, 1
      %p142 = scmp.eq.s32.totalorder %s20, 1
      %p143 = scmp.ne.s32.totalorder %s138, %s140
      %p144 = scmp.eq.s32.totalorder %s20, 0
      %p145 = por %p143, %p144
      %p146 = scmp.ne.s32.totalorder %s138, %s140
      %p147 = scmp.eq.s32.totalorder %s25, 1
      %p148 = por %p146, %p147
      %p149 = scmp.ne.s32.totalorder %s140, %s141
      %p150 = scmp.eq.s32.totalorder %s25, 0
      %p151 = por %p149, %p150
      %p152 = scmp.ne.s32.totalorder %s140, %s141
      %p153 = scmp.eq.s32.totalorder %s26, 1
      %p154 = por %p152, %p153
      %p156 = scmp.ne.s32.totalorder %s141, %s155
      %p157 = scmp.eq.s32.totalorder %s26, 0
      %p158 = por %p156, %p157
      %s159 = ssub.s32 %s20, %s27
      %p160 = scmp.eq.s32.totalorder %s159, 0
      %s162 = sadd.s32 %s161, 1
      %s163 = scalar_select %p160, %s161, %s162
      %p166 = pneg %p160
      %p167 = scmp.eq.s32.totalorder %s20, 1
      %p168 = por %p166, %p167
      %p169 = scmp.ne.s32.totalorder %s161, %s164
      %p170 = scmp.eq.s32.totalorder %s20, 0
      %p171 = por %p169, %p170
      %p172 = scmp.ne.s32.totalorder %s161, %s164
      %p173 = scmp.eq.s32.totalorder %s25, 1
      %p174 = por %p172, %p173
      %p175 = scmp.ne.s32.totalorder %s164, %s165
      %p176 = scmp.eq.s32.totalorder %s25, 0
      %p177 = por %p175, %p176
      %p178 = scmp.ne.s32.totalorder %s164, %s165
      %p179 = scmp.eq.s32.totalorder %s26, 1
      %p180 = por %p178, %p179
      %p182 = scmp.ne.s32.totalorder %s165, %s181
      %p183 = scmp.eq.s32.totalorder %s26, 0
      %p184 = por %p182, %p183
      %p185 = scmp.le.s32.totalorder 1, %s20
      %p186 = scmp.lt.s32.totalorder %s20, 3
      %p187 = pnand %p185, %p186
      %p188 = pneg %p187
      // Predicated region
      $region9: #{tpu_custom_call.1} parent=5 // pred_check
        _
      $region10: #{tpu_custom_call.1} parent=5 // pred_check_branch
        %190 = sbr.rel (%p187) target = $region12
      $region11: #{tpu_custom_call.1} parent=5 // pred_region
        %s191 = ssub.s32 %s20, 1
        // Predicated region
        $region13: #{tpu_custom_call.1} parent=11 // pred_check
          %p192 = pneg %p67
        $region14: #{tpu_custom_call.1} parent=11 // pred_check_branch
          %194 = sbr.rel (%p192) target = $region16
        $region15: #{tpu_custom_call.1} parent=11 // pred_region
          %s196 = ssub.s32 512, 512
          %197 = vsyncadd [#allocation6], %s196
          %s198 = sshll.u32 [#allocation5], 4
          %s199 = int_to_ptr.vmem [resolvable:$true] %s198
          %204 = dma.hbm_to_vmem [thread:$0]  %s1, 512, %s199, [#allocation6], 128, 128, 8
        $region16: #{tpu_custom_call.1} parent=11 // pred_fallthru
          _
        // Predicated region
        $region17: #{tpu_custom_call.1} parent=11 // pred_check
          %p205 = pneg %p88
        $region18: #{tpu_custom_call.1} parent=11 // pred_check_branch
          %207 = sbr.rel (%p205) target = $region20
        $region19: #{tpu_custom_call.1} parent=11 // pred_region
          %s209 = ssub.s32 512, 512
          %210 = vsyncadd [#allocation6], %s209
          %s211 = sshll.u32 [#allocation7], 4
          %s212 = int_to_ptr.vmem [resolvable:$true] %s211
          %217 = dma.hbm_to_vmem [thread:$0]  %s2, 512, %s212, [#allocation6], 128, 128, 8
        $region20: #{tpu_custom_call.1} parent=11 // pred_fallthru
          _
        // Predicated region
        $region21: #{tpu_custom_call.1} parent=11 // pred_check
          %p218 = pneg %p109
        $region22: #{tpu_custom_call.1} parent=11 // pred_check_branch
          %220 = sbr.rel (%p218) target = $region24
        $region23: #{tpu_custom_call.1} parent=11 // pred_region
          _
        $region24: #{tpu_custom_call.1} parent=11 // pred_fallthru
          _
        // Predicated region
        $region25: #{tpu_custom_call.1} parent=11 // pred_check
          %p221 = pneg %p130
        $region26: #{tpu_custom_call.1} parent=11 // pred_check_branch
          %223 = sbr.rel (%p221) target = $region28
        $region27: #{tpu_custom_call.1} parent=11 // pred_region
          %s225 = ssub.s32 512, 512
          %226 = vsyncadd [#allocation9], %s225
          %s227 = sshll.u32 [#allocation8], 4
          %s228 = int_to_ptr.vmem [resolvable:$true] %s227
          %233 = dma.hbm_to_vmem [thread:$0]  %s4, 512, %s228, [#allocation9], 128, 128, 8
        $region28: #{tpu_custom_call.1} parent=11 // pred_fallthru
          _
        // Predicated region
        $region29: #{tpu_custom_call.1} parent=11 // pred_check
          %p234 = pneg %p151
        $region30: #{tpu_custom_call.1} parent=11 // pred_check_branch
          %236 = sbr.rel (%p234) target = $region32
        $region31: #{tpu_custom_call.1} parent=11 // pred_region
          _
        $region32: #{tpu_custom_call.1} parent=11 // pred_fallthru
          _
      $region12: #{tpu_custom_call.1} parent=5 // pred_fallthru
        _
      %p237 = scmp.lt.s32.totalorder %s20, 2
      // Predicated region
      $region33: #{tpu_custom_call.1} parent=5 // pred_check
        %p238 = pneg %p237
      $region34: #{tpu_custom_call.1} parent=5 // pred_check_branch
        %240 = sbr.rel (%p238) target = $region36
      $region35: #{tpu_custom_call.1} parent=5 // pred_region
        // Predicated region
        $region37: #{tpu_custom_call.1} parent=35 // pred_check
          %p241 = pneg %p40
        $region38: #{tpu_custom_call.1} parent=35 // pred_check_branch
          %243 = sbr.rel (%p241) target = $region40
        $region39: #{tpu_custom_call.1} parent=35 // pred_region
          %s244 = sand.u32 %s30, 1
          %s245 = scalar_lea.sflag [#allocation3], %s244
          %s246 = sand.u32 %s30, 1
          %s247 = smul.addr %s246, 16
          %s248 = scalar_lea.vmem [#allocation2], %s247
          %s250 = ssub.s32 256, 256
          %251 = vsyncadd %s245, %s250
          %s252 = smul.addr %s20, 2
          %s253 = smul.addr %s252, 128
          %s254 = scalar_lea.hbm %s0, %s253
          %s255 = sshll.u32 %s248, 4
          %s256 = int_to_ptr.vmem [resolvable:$true] %s255
          %261 = dma.hbm_to_vmem [thread:$0]  %s254, 256, %s256, %s245, 128, 128, 8
        $region40: #{tpu_custom_call.1} parent=35 // pred_fallthru
          _
      $region36: #{tpu_custom_call.1} parent=5 // pred_fallthru
        _
      %p262 = scmp.le.s32.totalorder 1, %s20
      %p263 = scmp.lt.s32.totalorder %s20, 3
      %p264 = pnand %p262, %p263
      %p265 = pneg %p264
      // Predicated region
      $region41: #{tpu_custom_call.1} parent=5 // pred_check
        _
      $region42: #{tpu_custom_call.1} parent=5 // pred_check_branch
        %267 = sbr.rel (%p264) target = $region44
      $region43: #{tpu_custom_call.1} parent=5 // pred_region
        %s268 = ssub.s32 %s20, 1
        %s269 = sand.u32 %s33, 1
        %s270 = scalar_lea.sflag [#allocation3], %s269
        %s271 = sand.u32 %s33, 1
        %s272 = smul.addr %s271, 16
        %s273 = scalar_lea.vmem [#allocation2], %s272
        // Predicated region
        $region45: #{tpu_custom_call.1} parent=43 // pred_check
          %p274 = pneg %p46
        $region46: #{tpu_custom_call.1} parent=43 // pred_check_branch
          %276 = sbr.rel (%p274) target = $region48
        $region47: #{tpu_custom_call.1} parent=43 // pred_region
          %277 = dma.done %s270, 256
        $region48: #{tpu_custom_call.1} parent=43 // pred_fallthru
          _
        // Predicated region
        $region49: #{tpu_custom_call.1} parent=43 // pred_check
          %p278 = pneg %p67
        $region50: #{tpu_custom_call.1} parent=43 // pred_check_branch
          %280 = sbr.rel (%p278) target = $region52
        $region51: #{tpu_custom_call.1} parent=43 // pred_region
          %281 = dma.done [#allocation6], 512
        $region52: #{tpu_custom_call.1} parent=43 // pred_fallthru
          _
        // Predicated region
        $region53: #{tpu_custom_call.1} parent=43 // pred_check
          %p282 = pneg %p88
        $region54: #{tpu_custom_call.1} parent=43 // pred_check_branch
          %284 = sbr.rel (%p282) target = $region56
        $region55: #{tpu_custom_call.1} parent=43 // pred_region
          %285 = dma.done [#allocation6], 512
        $region56: #{tpu_custom_call.1} parent=43 // pred_fallthru
          _
        // Predicated region
        $region57: #{tpu_custom_call.1} parent=43 // pred_check
          %p286 = pneg %p130
        $region58: #{tpu_custom_call.1} parent=43 // pred_check_branch
          %288 = sbr.rel (%p286) target = $region60
        $region59: #{tpu_custom_call.1} parent=43 // pred_region
          %289 = dma.done [#allocation9], 512
        $region60: #{tpu_custom_call.1} parent=43 // pred_fallthru
          _
        %s290 = sand.u32 %s33, 1
        %s291 = scalar_lea.sflag [#allocation3], %s290
        %s292 = sand.u32 %s33, 1
        %s293 = smul.addr %s292, 16
        %s294 = scalar_lea.vmem [#allocation2], %s293
        %p295 = pneg %p46
        %p296 = pneg %p43
        %p297 = pneg %p67
        %p298 = pneg %p64
        %p299 = pneg %p88
        %p300 = pneg %p85
        %p301 = pneg %p109
        %p302 = pneg %p106
        %p303 = pneg %p130
        %p304 = pneg %p127
        %p305 = pneg %p151
        %p306 = pneg %p148
        %p307 = pneg %p177
        %p308 = pneg %p174
        %s309 = sand.u32 %s164, 1
        %s310 = scalar_lea.sflag [#allocation4], %s309
        %s311 = sand.u32 %s164, 1
        %s312 = smul.addr %s311, 16
        %s313 = scalar_lea.vmem [#allocation10], %s312
        %v314 = vld [vmem:[%s273] sm:$0xff]
        %v315 = vld [vmem:[%s273 + $0x8] sm:$0xff]
        %v316 = vld [vmem:[#allocation5] sm:$0xff]
        %v317 = vld [vmem:[#allocation5 + $0x8] sm:$0xff]
        %v318 = vld [vmem:[#allocation5 + $0x10] sm:$0xff]
        %v319 = vld [vmem:[#allocation5 + $0x18] sm:$0xff]
        %v320 = vld [vmem:[%s3] sm:$0x1]
        %v322 = vlaneseq
        %v323 = vshrl.u32 %v322, 7
        %v324 = vsub.s32 0, %v323
        %v325 = vrot.slane %v320, %v324
        %vm327 = vcmask 261120
        %v329 = vsel %vm327, %v314, 0
        %v332 = vsel %vm327, %v315, 0
        %334 = vmatprep.subr.mxu0 0.0
        %335 = vmatpush1.msra.mxu0 %v316
        %336 = vmatprep.subr.mxu0 0.0
        %337 = vmatpush1.msra.mxu0 %v317
        %338 = vmatprep.subr.mxu0 0.0
        %339 = vmatpush1.msra.mxu0 %v318
        %340 = vmatprep.subr.mxu0 0.0
        %341 = vmatpush1.msra.mxu0 %v319
        %342 = vmatprep.subr.mxu0 0.0
        %343 = vmatpush1.msra.mxu0 0.0
        %344 = vmatprep.subr.mxu0 0.0
        %345 = vmatpush1.msra.mxu0 0.0
        %346 = vmatprep.subr.mxu0 0.0
        %347 = vmatpush1.msra.mxu0 0.0
        %348 = vmatprep.subr.mxu0 0.0
        %349 = vmatpush1.msra.mxu0 0.0
        %350 = vmatprep.subr.mxu0 0.0
        %351 = vmatpush1.msra.mxu0 0.0
        %352 = vmatprep.subr.mxu0 0.0
        %353 = vmatpush1.msra.mxu0 0.0
        %354 = vmatprep.subr.mxu0 0.0
        %355 = vmatpush1.msra.mxu0 0.0
        %356 = vmatprep.subr.mxu0 0.0
        %357 = vmatpush1.msra.mxu0 0.0
        %358 = vmatprep.subr.mxu0 0.0
        %359 = vmatpush1.msra.mxu0 0.0
        %360 = vmatprep.subr.mxu0 0.0
        %361 = vmatpush1.msra.mxu0 0.0
        %362 = vmatprep.subr.mxu0 0.0
        %363 = vmatpush1.msra.mxu0 0.0
        %364 = vmatprep.subr.mxu0 0.0
        %365 = vmatpush1.msra.mxu0 0.0
        %366 = vmatprep.subr.mxu0 0.0
        %367 = vmatpush1.msra.mxu0 0.0
        %368 = vmatprep.subr.mxu0 0.0
        %369 = vmatpush1.msra.mxu0 0.0
        %370 = vmatprep.subr.mxu0 0.0
        %371 = vmatpush1.msra.mxu0 0.0
        %372 = vmatprep.subr.mxu0 0.0
        %373 = vmatpush1.msra.mxu0 0.0
        %374 = vmatprep.subr.mxu0 0.0
        %375 = vmatpush1.msra.mxu0 0.0
        %376 = vmatprep.subr.mxu0 0.0
        %377 = vmatpush1.msra.mxu0 0.0
        %378 = vmatprep.subr.mxu0 0.0
        %379 = vmatpush1.msra.mxu0 0.0
        %380 = vmatprep.subr.mxu0 0.0
        %381 = vmatpush1.msra.mxu0 0.0
        %382 = vmatprep.subr.mxu0 0.0
        %383 = vmatpush1.msra.mxu0 0.0
        %384 = vmatprep.subr.mxu0 0.0
        %385 = vmatpush1.msra.mxu0 0.0
        %386 = vmatprep.subr.mxu0 0.0
        %387 = vmatpush1.msra.mxu0 0.0
        %388 = vmatprep.subr.mxu0 0.0
        %389 = vmatpush1.msra.mxu0 0.0
        %390 = vmatprep.subr.mxu0 0.0
        %391 = vmatpush1.msra.mxu0 0.0
        %392 = vmatprep.subr.mxu0 0.0
        %393 = vmatpush1.msra.mxu0 0.0
        %394 = vmatprep.subr.mxu0 0.0
        %395 = vmatpush1.msra.mxu0 0.0
        %396 = vmatprep.subr.mxu0 0.0
        %397 = vmatpush1.msra.mxu0 0.0
        %398 = vmatprep.mubr.f32.mxu0 0.0
        %399 = vmatmul.mubr.f32.gmra.mrb[0].mxu0 %v329
        %v400 = vpop.f32.mrb[0].mxu0
        %v401 = vadd.f32 %v325, %v400
        %v402 = vpop.f32.mrb[0].mxu0
        %403 = vmatprep.mubr.f32.mxu0 0.0
        %404 = vmatmul.mubr.f32.gmra.mrb[0].mxu0 %v332
        %v405 = vpop.f32.mrb[0].mxu0
        %v406 = vadd.f32 %v325, %v405
        %v407 = vpop.f32.mrb[0].mxu0
        %408 = vdwg.mxu0
        %v409 = vld [vmem:[#allocation7] sm:$0xff]
        %v410 = vld [vmem:[#allocation7 + $0x8] sm:$0xff]
        %v411 = vld [vmem:[#allocation7 + $0x10] sm:$0xff]
        %v412 = vld [vmem:[#allocation7 + $0x18] sm:$0xff]
        %v414 = vsel %vm327, 0.0, 0
        %416 = vmatprep.subr.mxu0 0.0
        %417 = vmatpush1.msra.mxu0 %v409
        %418 = vmatprep.subr.mxu0 0.0
        %419 = vmatpush1.msra.mxu0 %v410
        %420 = vmatprep.subr.mxu0 0.0
        %421 = vmatpush1.msra.mxu0 %v411
        %422 = vmatprep.subr.mxu0 0.0
        %423 = vmatpush1.msra.mxu0 %v412
        %424 = vmatprep.subr.mxu0 0.0
        %425 = vmatpush1.msra.mxu0 0.0
        %426 = vmatprep.subr.mxu0 0.0
        %427 = vmatpush1.msra.mxu0 0.0
        %428 = vmatprep.subr.mxu0 0.0
        %429 = vmatpush1.msra.mxu0 0.0
        %430 = vmatprep.subr.mxu0 0.0
        %431 = vmatpush1.msra.mxu0 0.0
        %432 = vmatprep.subr.mxu0 0.0
        %433 = vmatpush1.msra.mxu0 0.0
        %434 = vmatprep.subr.mxu0 0.0
        %435 = vmatpush1.msra.mxu0 0.0
        %436 = vmatprep.subr.mxu0 0.0
        %437 = vmatpush1.msra.mxu0 0.0
        %438 = vmatprep.subr.mxu0 0.0
        %439 = vmatpush1.msra.mxu0 0.0
        %440 = vmatprep.subr.mxu0 0.0
        %441 = vmatpush1.msra.mxu0 0.0
        %442 = vmatprep.subr.mxu0 0.0
        %443 = vmatpush1.msra.mxu0 0.0
        %444 = vmatprep.subr.mxu0 0.0
        %445 = vmatpush1.msra.mxu0 0.0
        %446 = vmatprep.subr.mxu0 0.0
        %447 = vmatpush1.msra.mxu0 0.0
        %448 = vmatprep.subr.mxu0 0.0
        %449 = vmatpush1.msra.mxu0 0.0
        %450 = vmatprep.subr.mxu0 0.0
        %451 = vmatpush1.msra.mxu0 0.0
        %452 = vmatprep.subr.mxu0 0.0
        %453 = vmatpush1.msra.mxu0 0.0
        %454 = vmatprep.subr.mxu0 0.0
        %455 = vmatpush1.msra.mxu0 0.0
        %456 = vmatprep.subr.mxu0 0.0
        %457 = vmatpush1.msra.mxu0 0.0
        %458 = vmatprep.subr.mxu0 0.0
        %459 = vmatpush1.msra.mxu0 0.0
        %460 = vmatprep.subr.mxu0 0.0
        %461 = vmatpush1.msra.mxu0 0.0
        %462 = vmatprep.subr.mxu0 0.0
        %463 = vmatpush1.msra.mxu0 0.0
        %464 = vmatprep.subr.mxu0 0.0
        %465 = vmatpush1.msra.mxu0 0.0
        %466 = vmatprep.subr.mxu0 0.0
        %467 = vmatpush1.msra.mxu0 0.0
        %468 = vmatprep.subr.mxu0 0.0
        %469 = vmatpush1.msra.mxu0 0.0
        %470 = vmatprep.subr.mxu0 0.0
        %471 = vmatpush1.msra.mxu0 0.0
        %472 = vmatprep.subr.mxu0 0.0
        %473 = vmatpush1.msra.mxu0 0.0
        %474 = vmatprep.subr.mxu0 0.0
        %475 = vmatpush1.msra.mxu0 0.0
        %476 = vmatprep.subr.mxu0 0.0
        %477 = vmatpush1.msra.mxu0 0.0
        %478 = vmatprep.subr.mxu0 0.0
        %479 = vmatpush1.msra.mxu0 0.0
        %480 = vmatprep.mubr.f32.mxu0 0.0
        %481 = vmatmul.mubr.f32.gmra.mrb[0].mxu0 %v414
        %v482 = vpop.f32.mrb[0].mxu0
        %v483 = vadd.f32 0.0, %v482
        %v484 = vpop.f32.mrb[0].mxu0
        %485 = vdwg.mxu0
        %v486 = vadd.f32 %v401, %v483
        %v487 = vxor.u32 %v486, 2147483648
        %v488 = vmul.f32 %v487, 1.442695
        %v489 = vpow.pop %v488
        %v490 = vadd.f32 %v489, 1.0
        %v491 = vrcp.pop %v490
        %v492 = vmul.f32 1.0, %v491
        %v493 = vmul.f32 %v492, 2.0
        %v494 = vsub.f32 %v493, 1.0
        %v495 = vmul.f32 %v492, 0.0
        %497 = vrot.lane.b32.xlu0 %v494, 64
        %v498 = vpop.permute.xlu0 %497
        %v500 = vmul.f32 %v492, %v498
        %502 = vrot.lane.b32.xlu0 %v500, 32
        %v503 = vpop.permute.xlu0 %502
        %v505 = vadd.f32 %v495, %v503
        %v506 = vtanh.pop %v505
        %508 = vrot.lane.b32.xlu0 %v506, 64
        %v509 = vpop.permute.xlu0 %508
        %v511 = vmul.f32 %v492, %v509
        %513 = vrot.lane.b32.xlu0 %v511, 32
        %v514 = vpop.permute.xlu0 %513
        %v515 = vsel %vm327, %v514, 0
        %517 = vmatprep.subr.mxu0 0.0
        %518 = vmatpush1.msra.mxu0 %v409
        %519 = vmatprep.subr.mxu0 0.0
        %520 = vmatpush1.msra.mxu0 %v410
        %521 = vmatprep.subr.mxu0 0.0
        %522 = vmatpush1.msra.mxu0 %v411
        %523 = vmatprep.subr.mxu0 0.0
        %524 = vmatpush1.msra.mxu0 %v412
        %525 = vmatprep.subr.mxu0 0.0
        %526 = vmatpush1.msra.mxu0 0.0
        %527 = vmatprep.subr.mxu0 0.0
        %528 = vmatpush1.msra.mxu0 0.0
        %529 = vmatprep.subr.mxu0 0.0
        %530 = vmatpush1.msra.mxu0 0.0
        %531 = vmatprep.subr.mxu0 0.0
        %532 = vmatpush1.msra.mxu0 0.0
        %533 = vmatprep.subr.mxu0 0.0
        %534 = vmatpush1.msra.mxu0 0.0
        %535 = vmatprep.subr.mxu0 0.0
        %536 = vmatpush1.msra.mxu0 0.0
        %537 = vmatprep.subr.mxu0 0.0
        %538 = vmatpush1.msra.mxu0 0.0
        %539 = vmatprep.subr.mxu0 0.0
        %540 = vmatpush1.msra.mxu0 0.0
        %541 = vmatprep.subr.mxu0 0.0
        %542 = vmatpush1.msra.mxu0 0.0
        %543 = vmatprep.subr.mxu0 0.0
        %544 = vmatpush1.msra.mxu0 0.0
        %545 = vmatprep.subr.mxu0 0.0
        %546 = vmatpush1.msra.mxu0 0.0
        %547 = vmatprep.subr.mxu0 0.0
        %548 = vmatpush1.msra.mxu0 0.0
        %549 = vmatprep.subr.mxu0 0.0
        %550 = vmatpush1.msra.mxu0 0.0
        %551 = vmatprep.subr.mxu0 0.0
        %552 = vmatpush1.msra.mxu0 0.0
        %553 = vmatprep.subr.mxu0 0.0
        %554 = vmatpush1.msra.mxu0 0.0
        %555 = vmatprep.subr.mxu0 0.0
        %556 = vmatpush1.msra.mxu0 0.0
        %557 = vmatprep.subr.mxu0 0.0
        %558 = vmatpush1.msra.mxu0 0.0
        %559 = vmatprep.subr.mxu0 0.0
        %560 = vmatpush1.msra.mxu0 0.0
        %561 = vmatprep.subr.mxu0 0.0
        %562 = vmatpush1.msra.mxu0 0.0
        %563 = vmatprep.subr.mxu0 0.0
        %564 = vmatpush1.msra.mxu0 0.0
        %565 = vmatprep.subr.mxu0 0.0
        %566 = vmatpush1.msra.mxu0 0.0
        %567 = vmatprep.subr.mxu0 0.0
        %568 = vmatpush1.msra.mxu0 0.0
        %569 = vmatprep.subr.mxu0 0.0
        %570 = vmatpush1.msra.mxu0 0.0
        %571 = vmatprep.subr.mxu0 0.0
        %572 = vmatpush1.msra.mxu0 0.0
        %573 = vmatprep.subr.mxu0 0.0
        %574 = vmatpush1.msra.mxu0 0.0
        %575 = vmatprep.subr.mxu0 0.0
        %576 = vmatpush1.msra.mxu0 0.0
        %577 = vmatprep.subr.mxu0 0.0
        %578 = vmatpush1.msra.mxu0 0.0
        %579 = vmatprep.subr.mxu0 0.0
        %580 = vmatpush1.msra.mxu0 0.0
        %581 = vmatprep.mubr.f32.mxu0 0.0
        %582 = vmatmul.mubr.f32.gmra.mrb[0].mxu0 %v515
        %v583 = vpop.f32.mrb[0].mxu0
        %v584 = vadd.f32 0.0, %v583
        %v585 = vpop.f32.mrb[0].mxu0
        %586 = vdwg.mxu0
        %v588 = vrot.slane %v584, 6
        %v590 = vadd.f32 %v401, %v588
        %v591 = vxor.u32 %v590, 2147483648
        %v592 = vmul.f32 %v591, 1.442695
        %v593 = vpow.pop %v592
        %v594 = vadd.f32 %v593, 1.0
        %v595 = vrcp.pop %v594
        %v596 = vmul.f32 1.0, %v595
        %v597 = vmul.f32 %v596, 2.0
        %v598 = vsub.f32 %v597, 1.0
        %v600 = vrot.slane %v505, 6
        %v602 = vmul.f32 %v596, %v600
        %604 = vrot.lane.b32.xlu0 %v598, 64
        %v605 = vpop.permute.xlu0 %604
        %v607 = vmul.f32 %v596, %v605
        %609 = vrot.lane.b32.xlu0 %v607, 32
        %v610 = vpop.permute.xlu0 %609
        %v612 = vadd.f32 %v602, %v610
        %v613 = vtanh.pop %v612
        %615 = vrot.lane.b32.xlu0 %v613, 64
        %v616 = vpop.permute.xlu0 %615
        %v618 = vmul.f32 %v596, %v616
        %v620 = vrot.slane %v618, 2
        %621 = vrot.lane.b32.xlu0 %v620, 32
        %v622 = vpop.permute.xlu0 %621
        %v623 = vsel %vm327, %v622, 0
        %625 = vmatprep.subr.mxu0 0.0
        %626 = vmatpush1.msra.mxu0 %v409
        %627 = vmatprep.subr.mxu0 0.0
        %628 = vmatpush1.msra.mxu0 %v410
        %629 = vmatprep.subr.mxu0 0.0
        %630 = vmatpush1.msra.mxu0 %v411
        %631 = vmatprep.subr.mxu0 0.0
        %632 = vmatpush1.msra.mxu0 %v412
        %633 = vmatprep.subr.mxu0 0.0
        %634 = vmatpush1.msra.mxu0 0.0
        %635 = vmatprep.subr.mxu0 0.0
        %636 = vmatpush1.msra.mxu0 0.0
        %637 = vmatprep.subr.mxu0 0.0
        %638 = vmatpush1.msra.mxu0 0.0
        %639 = vmatprep.subr.mxu0 0.0
        %640 = vmatpush1.msra.mxu0 0.0
        %641 = vmatprep.subr.mxu0 0.0
        %642 = vmatpush1.msra.mxu0 0.0
        %643 = vmatprep.subr.mxu0 0.0
        %644 = vmatpush1.msra.mxu0 0.0
        %645 = vmatprep.subr.mxu0 0.0
        %646 = vmatpush1.msra.mxu0 0.0
        %647 = vmatprep.subr.mxu0 0.0
        %648 = vmatpush1.msra.mxu0 0.0
        %649 = vmatprep.subr.mxu0 0.0
        %650 = vmatpush1.msra.mxu0 0.0
        %651 = vmatprep.subr.mxu0 0.0
        %652 = vmatpush1.msra.mxu0 0.0
        %653 = vmatprep.subr.mxu0 0.0
        %654 = vmatpush1.msra.mxu0 0.0
        %655 = vmatprep.subr.mxu0 0.0
        %656 = vmatpush1.msra.mxu0 0.0
        %657 = vmatprep.subr.mxu0 0.0
        %658 = vmatpush1.msra.mxu0 0.0
        %659 = vmatprep.subr.mxu0 0.0
        %660 = vmatpush1.msra.mxu0 0.0
        %661 = vmatprep.subr.mxu0 0.0
        %662 = vmatpush1.msra.mxu0 0.0
        %663 = vmatprep.subr.mxu0 0.0
        %664 = vmatpush1.msra.mxu0 0.0
        %665 = vmatprep.subr.mxu0 0.0
        %666 = vmatpush1.msra.mxu0 0.0
        %667 = vmatprep.subr.mxu0 0.0
        %668 = vmatpush1.msra.mxu0 0.0
        %669 = vmatprep.subr.mxu0 0.0
        %670 = vmatpush1.msra.mxu0 0.0
        %671 = vmatprep.subr.mxu0 0.0
        %672 = vmatpush1.msra.mxu0 0.0
        %673 = vmatprep.subr.mxu0 0.0
        %674 = vmatpush1.msra.mxu0 0.0
        %675 = vmatprep.subr.mxu0 0.0
        %676 = vmatpush1.msra.mxu0 0.0
        %677 = vmatprep.subr.mxu0 0.0
        %678 = vmatpush1.msra.mxu0 0.0
        %679 = vmatprep.subr.mxu0 0.0
        %680 = vmatpush1.msra.mxu0 0.0
        %681 = vmatprep.subr.mxu0 0.0
        %682 = vmatpush1.msra.mxu0 0.0
        %683 = vmatprep.subr.mxu0 0.0
        %684 = vmatpush1.msra.mxu0 0.0
        %685 = vmatprep.subr.mxu0 0.0
        %686 = vmatpush1.msra.mxu0 0.0
        %687 = vmatprep.subr.mxu0 0.0
        %688 = vmatpush1.msra.mxu0 0.0
        %689 = vmatprep.mubr.f32.mxu0 0.0
        %690 = vmatmul.mubr.f32.gmra.mrb[0].mxu0 %v623
        %v691 = vpop.f32.mrb[0].mxu0
        %v692 = vadd.f32 0.0, %v691
        %v693 = vpop.f32.mrb[0].mxu0
        %694 = vdwg.mxu0
        %v696 = vrot.slane %v692, 4
        %v698 = vadd.f32 %v401, %v696
        %v699 = vxor.u32 %v698, 2147483648
        %v700 = vmul.f32 %v699, 1.442695
        %v701 = vpow.pop %v700
        %v702 = vadd.f32 %v701, 1.0
        %v703 = vrcp.pop %v702
        %v704 = vmul.f32 1.0, %v703
        %v705 = vmul.f32 %v704, 2.0
        %v706 = vsub.f32 %v705, 1.0
        %v708 = vrot.slane %v612, 6
        %v710 = vmul.f32 %v704, %v708
        %712 = vrot.lane.b32.xlu0 %v706, 64
        %v713 = vpop.permute.xlu0 %712
        %v715 = vmul.f32 %v704, %v713
        %717 = vrot.lane.b32.xlu0 %v715, 32
        %v718 = vpop.permute.xlu0 %717
        %v720 = vadd.f32 %v710, %v718
        %v721 = vtanh.pop %v720
        %723 = vrot.lane.b32.xlu0 %v721, 64
        %v724 = vpop.permute.xlu0 %723
        %v726 = vmul.f32 %v704, %v724
        %v728 = vrot.slane %v726, 4
        %729 = vrot.lane.b32.xlu0 %v728, 32
        %v730 = vpop.permute.xlu0 %729
        %v731 = vsel %vm327, %v730, 0
        %733 = vmatprep.subr.mxu0 0.0
        %734 = vmatpush1.msra.mxu0 %v409
        %735 = vmatprep.subr.mxu0 0.0
        %736 = vmatpush1.msra.mxu0 %v410
        %737 = vmatprep.subr.mxu0 0.0
        %738 = vmatpush1.msra.mxu0 %v411
        %739 = vmatprep.subr.mxu0 0.0
        %740 = vmatpush1.msra.mxu0 %v412
        %741 = vmatprep.subr.mxu0 0.0
        %742 = vmatpush1.msra.mxu0 0.0
        %743 = vmatprep.subr.mxu0 0.0
        %744 = vmatpush1.msra.mxu0 0.0
        %745 = vmatprep.subr.mxu0 0.0
        %746 = vmatpush1.msra.mxu0 0.0
        %747 = vmatprep.subr.mxu0 0.0
        %748 = vmatpush1.msra.mxu0 0.0
        %749 = vmatprep.subr.mxu0 0.0
        %750 = vmatpush1.msra.mxu0 0.0
        %751 = vmatprep.subr.mxu0 0.0
        %752 = vmatpush1.msra.mxu0 0.0
        %753 = vmatprep.subr.mxu0 0.0
        %754 = vmatpush1.msra.mxu0 0.0
        %755 = vmatprep.subr.mxu0 0.0
        %756 = vmatpush1.msra.mxu0 0.0
        %757 = vmatprep.subr.mxu0 0.0
        %758 = vmatpush1.msra.mxu0 0.0
        %759 = vmatprep.subr.mxu0 0.0
        %760 = vmatpush1.msra.mxu0 0.0
        %761 = vmatprep.subr.mxu0 0.0
        %762 = vmatpush1.msra.mxu0 0.0
        %763 = vmatprep.subr.mxu0 0.0
        %764 = vmatpush1.msra.mxu0 0.0
        %765 = vmatprep.subr.mxu0 0.0
        %766 = vmatpush1.msra.mxu0 0.0
        %767 = vmatprep.subr.mxu0 0.0
        %768 = vmatpush1.msra.mxu0 0.0
        %769 = vmatprep.subr.mxu0 0.0
        %770 = vmatpush1.msra.mxu0 0.0
        %771 = vmatprep.subr.mxu0 0.0
        %772 = vmatpush1.msra.mxu0 0.0
        %773 = vmatprep.subr.mxu0 0.0
        %774 = vmatpush1.msra.mxu0 0.0
        %775 = vmatprep.subr.mxu0 0.0
        %776 = vmatpush1.msra.mxu0 0.0
        %777 = vmatprep.subr.mxu0 0.0
        %778 = vmatpush1.msra.mxu0 0.0
        %779 = vmatprep.subr.mxu0 0.0
        %780 = vmatpush1.msra.mxu0 0.0
        %781 = vmatprep.subr.mxu0 0.0
        %782 = vmatpush1.msra.mxu0 0.0
        %783 = vmatprep.subr.mxu0 0.0
        %784 = vmatpush1.msra.mxu0 0.0
        %785 = vmatprep.subr.mxu0 0.0
        %786 = vmatpush1.msra.mxu0 0.0
        %787 = vmatprep.subr.mxu0 0.0
        %788 = vmatpush1.msra.mxu0 0.0
        %789 = vmatprep.subr.mxu0 0.0
        %790 = vmatpush1.msra.mxu0 0.0
        %791 = vmatprep.subr.mxu0 0.0
        %792 = vmatpush1.msra.mxu0 0.0
        %793 = vmatprep.subr.mxu0 0.0
        %794 = vmatpush1.msra.mxu0 0.0
        %795 = vmatprep.subr.mxu0 0.0
        %796 = vmatpush1.msra.mxu0 0.0
        %797 = vmatprep.mubr.f32.mxu0 0.0
        %798 = vmatmul.mubr.f32.gmra.mrb[0].mxu0 %v731
        %v799 = vpop.f32.mrb[0].mxu0
        %v800 = vadd.f32 0.0, %v799
        %v801 = vpop.f32.mrb[0].mxu0
        %802 = vdwg.mxu0
        %v804 = vrot.slane %v800, 2
        %v806 = vadd.f32 %v401, %v804
        %v807 = vxor.u32 %v806, 2147483648
        %v808 = vmul.f32 %v807, 1.442695
        %v809 = vpow.pop %v808
        %v810 = vadd.f32 %v809, 1.0
        %v811 = vrcp.pop %v810
        %v812 = vmul.f32 1.0, %v811
        %v813 = vmul.f32 %v812, 2.0
        %v814 = vsub.f32 %v813, 1.0
        %v816 = vrot.slane %v720, 6
        %v818 = vmul.f32 %v812, %v816
        %820 = vrot.lane.b32.xlu0 %v814, 64
        %v821 = vpop.permute.xlu0 %820
        %v823 = vmul.f32 %v812, %v821
        %825 = vrot.lane.b32.xlu0 %v823, 32
        %v826 = vpop.permute.xlu0 %825
        %v828 = vadd.f32 %v818, %v826
        %v829 = vtanh.pop %v828
        %831 = vrot.lane.b32.xlu0 %v829, 64
        %v832 = vpop.permute.xlu0 %831
        %v834 = vmul.f32 %v812, %v832
        %v836 = vrot.slane %v834, 6
        %837 = vrot.lane.b32.xlu0 %v836, 32
        %v838 = vpop.permute.xlu0 %837
        %v839 = vsel %vm327, %v838, 0
        %841 = vmatprep.subr.mxu0 0.0
        %842 = vmatpush1.msra.mxu0 %v409
        %843 = vmatprep.subr.mxu0 0.0
        %844 = vmatpush1.msra.mxu0 %v410
        %845 = vmatprep.subr.mxu0 0.0
        %846 = vmatpush1.msra.mxu0 %v411
        %847 = vmatprep.subr.mxu0 0.0
        %848 = vmatpush1.msra.mxu0 %v412
        %849 = vmatprep.subr.mxu0 0.0
        %850 = vmatpush1.msra.mxu0 0.0
        %851 = vmatprep.subr.mxu0 0.0
        %852 = vmatpush1.msra.mxu0 0.0
        %853 = vmatprep.subr.mxu0 0.0
        %854 = vmatpush1.msra.mxu0 0.0
        %855 = vmatprep.subr.mxu0 0.0
        %856 = vmatpush1.msra.mxu0 0.0
        %857 = vmatprep.subr.mxu0 0.0
        %858 = vmatpush1.msra.mxu0 0.0
        %859 = vmatprep.subr.mxu0 0.0
        %860 = vmatpush1.msra.mxu0 0.0
        %861 = vmatprep.subr.mxu0 0.0
        %862 = vmatpush1.msra.mxu0 0.0
        %863 = vmatprep.subr.mxu0 0.0
        %864 = vmatpush1.msra.mxu0 0.0
        %865 = vmatprep.subr.mxu0 0.0
        %866 = vmatpush1.msra.mxu0 0.0
        %867 = vmatprep.subr.mxu0 0.0
        %868 = vmatpush1.msra.mxu0 0.0
        %869 = vmatprep.subr.mxu0 0.0
        %870 = vmatpush1.msra.mxu0 0.0
        %871 = vmatprep.subr.mxu0 0.0
        %872 = vmatpush1.msra.mxu0 0.0
        %873 = vmatprep.subr.mxu0 0.0
        %874 = vmatpush1.msra.mxu0 0.0
        %875 = vmatprep.subr.mxu0 0.0
        %876 = vmatpush1.msra.mxu0 0.0
        %877 = vmatprep.subr.mxu0 0.0
        %878 = vmatpush1.msra.mxu0 0.0
        %879 = vmatprep.subr.mxu0 0.0
        %880 = vmatpush1.msra.mxu0 0.0
        %881 = vmatprep.subr.mxu0 0.0
        %882 = vmatpush1.msra.mxu0 0.0
        %883 = vmatprep.subr.mxu0 0.0
        %884 = vmatpush1.msra.mxu0 0.0
        %885 = vmatprep.subr.mxu0 0.0
        %886 = vmatpush1.msra.mxu0 0.0
        %887 = vmatprep.subr.mxu0 0.0
        %888 = vmatpush1.msra.mxu0 0.0
        %889 = vmatprep.subr.mxu0 0.0
        %890 = vmatpush1.msra.mxu0 0.0
        %891 = vmatprep.subr.mxu0 0.0
        %892 = vmatpush1.msra.mxu0 0.0
        %893 = vmatprep.subr.mxu0 0.0
        %894 = vmatpush1.msra.mxu0 0.0
        %895 = vmatprep.subr.mxu0 0.0
        %896 = vmatpush1.msra.mxu0 0.0
        %897 = vmatprep.subr.mxu0 0.0
        %898 = vmatpush1.msra.mxu0 0.0
        %899 = vmatprep.subr.mxu0 0.0
        %900 = vmatpush1.msra.mxu0 0.0
        %901 = vmatprep.subr.mxu0 0.0
        %902 = vmatpush1.msra.mxu0 0.0
        %903 = vmatprep.subr.mxu0 0.0
        %904 = vmatpush1.msra.mxu0 0.0
        %905 = vmatprep.mubr.f32.mxu0 0.0
        %906 = vmatmul.mubr.f32.gmra.mrb[0].mxu0 %v839
        %v907 = vpop.f32.mrb[0].mxu0
        %v908 = vadd.f32 0.0, %v907
        %v909 = vpop.f32.mrb[0].mxu0
        %910 = vdwg.mxu0
        %v911 = vadd.f32 %v406, %v908
        %v912 = vxor.u32 %v911, 2147483648
        %v913 = vmul.f32 %v912, 1.442695
        %v914 = vpow.pop %v913
        %v915 = vadd.f32 %v914, 1.0
        %v916 = vrcp.pop %v915
        %v917 = vmul.f32 1.0, %v916
        %v918 = vmul.f32 %v917, 2.0
        %v919 = vsub.f32 %v918, 1.0
        %v921 = vrot.slane %v828, 6
        %v923 = vmul.f32 %v917, %v921
        %925 = vrot.lane.b32.xlu0 %v919, 64
        %v926 = vpop.permute.xlu0 %925
        %v928 = vmul.f32 %v917, %v926
        %930 = vrot.lane.b32.xlu0 %v928, 32
        %v931 = vpop.permute.xlu0 %930
        %v933 = vadd.f32 %v923, %v931
        %v934 = vtanh.pop %v933
        %936 = vrot.lane.b32.xlu0 %v934, 64
        %v937 = vpop.permute.xlu0 %936
        %v939 = vmul.f32 %v917, %v937
        %941 = vrot.lane.b32.xlu0 %v939, 32
        %v942 = vpop.permute.xlu0 %941
        %v943 = vsel %vm327, %v942, 0
        %945 = vmatprep.subr.mxu0 0.0
        %946 = vmatpush1.msra.mxu0 %v409
        %947 = vmatprep.subr.mxu0 0.0
        %948 = vmatpush1.msra.mxu0 %v410
        %949 = vmatprep.subr.mxu0 0.0
        %950 = vmatpush1.msra.mxu0 %v411
        %951 = vmatprep.subr.mxu0 0.0
        %952 = vmatpush1.msra.mxu0 %v412
        %953 = vmatprep.subr.mxu0 0.0
        %954 = vmatpush1.msra.mxu0 0.0
        %955 = vmatprep.subr.mxu0 0.0
        %956 = vmatpush1.msra.mxu0 0.0
        %957 = vmatprep.subr.mxu0 0.0
        %958 = vmatpush1.msra.mxu0 0.0
        %959 = vmatprep.subr.mxu0 0.0
        %960 = vmatpush1.msra.mxu0 0.0
        %961 = vmatprep.subr.mxu0 0.0
        %962 = vmatpush1.msra.mxu0 0.0
        %963 = vmatprep.subr.mxu0 0.0
        %964 = vmatpush1.msra.mxu0 0.0
        %965 = vmatprep.subr.mxu0 0.0
        %966 = vmatpush1.msra.mxu0 0.0
        %967 = vmatprep.subr.mxu0 0.0
        %968 = vmatpush1.msra.mxu0 0.0
        %969 = vmatprep.subr.mxu0 0.0
        %970 = vmatpush1.msra.mxu0 0.0
        %971 = vmatprep.subr.mxu0 0.0
        %972 = vmatpush1.msra.mxu0 0.0
        %973 = vmatprep.subr.mxu0 0.0
        %974 = vmatpush1.msra.mxu0 0.0
        %975 = vmatprep.subr.mxu0 0.0
        %976 = vmatpush1.msra.mxu0 0.0
        %977 = vmatprep.subr.mxu0 0.0
        %978 = vmatpush1.msra.mxu0 0.0
        %979 = vmatprep.subr.mxu0 0.0
        %980 = vmatpush1.msra.mxu0 0.0
        %981 = vmatprep.subr.mxu0 0.0
        %982 = vmatpush1.msra.mxu0 0.0
        %983 = vmatprep.subr.mxu0 0.0
        %984 = vmatpush1.msra.mxu0 0.0
        %985 = vmatprep.subr.mxu0 0.0
        %986 = vmatpush1.msra.mxu0 0.0
        %987 = vmatprep.subr.mxu0 0.0
        %988 = vmatpush1.msra.mxu0 0.0
        %989 = vmatprep.subr.mxu0 0.0
        %990 = vmatpush1.msra.mxu0 0.0
        %991 = vmatprep.subr.mxu0 0.0
        %992 = vmatpush1.msra.mxu0 0.0
        %993 = vmatprep.subr.mxu0 0.0
        %994 = vmatpush1.msra.mxu0 0.0
        %995 = vmatprep.subr.mxu0 0.0
        %996 = vmatpush1.msra.mxu0 0.0
        %997 = vmatprep.subr.mxu0 0.0
        %998 = vmatpush1.msra.mxu0 0.0
        %999 = vmatprep.subr.mxu0 0.0
        %1000 = vmatpush1.msra.mxu0 0.0
        %1001 = vmatprep.subr.mxu0 0.0
        %1002 = vmatpush1.msra.mxu0 0.0
        %1003 = vmatprep.subr.mxu0 0.0
        %1004 = vmatpush1.msra.mxu0 0.0
        %1005 = vmatprep.subr.mxu0 0.0
        %1006 = vmatpush1.msra.mxu0 0.0
        %1007 = vmatprep.subr.mxu0 0.0
        %1008 = vmatpush1.msra.mxu0 0.0
        %1009 = vmatprep.mubr.f32.mxu0 0.0
        %1010 = vmatmul.mubr.f32.gmra.mrb[0].mxu0 %v943
        %v1011 = vpop.f32.mrb[0].mxu0
        %v1012 = vadd.f32 0.0, %v1011
        %v1013 = vpop.f32.mrb[0].mxu0
        %1014 = vdwg.mxu0
        %v1016 = vrot.slane %v1012, 6
        %v1018 = vadd.f32 %v406, %v1016
        %v1019 = vxor.u32 %v1018, 2147483648
        %v1020 = vmul.f32 %v1019, 1.442695
        %v1021 = vpow.pop %v1020
        %v1022 = vadd.f32 %v1021, 1.0
        %v1023 = vrcp.pop %v1022
        %v1024 = vmul.f32 1.0, %v1023
        %v1025 = vmul.f32 %v1024, 2.0
        %v1026 = vsub.f32 %v1025, 1.0
        %v1028 = vrot.slane %v933, 6
        %v1030 = vmul.f32 %v1024, %v1028
        %1032 = vrot.lane.b32.xlu0 %v1026, 64
        %v1033 = vpop.permute.xlu0 %1032
        %v1035 = vmul.f32 %v1024, %v1033
        %1037 = vrot.lane.b32.xlu0 %v1035, 32
        %v1038 = vpop.permute.xlu0 %1037
        %v1040 = vadd.f32 %v1030, %v1038
        %v1041 = vtanh.pop %v1040
        %1043 = vrot.lane.b32.xlu0 %v1041, 64
        %v1044 = vpop.permute.xlu0 %1043
        %v1046 = vmul.f32 %v1024, %v1044
        %v1048 = vrot.slane %v1046, 2
        %1049 = vrot.lane.b32.xlu0 %v1048, 32
        %v1050 = vpop.permute.xlu0 %1049
        %v1051 = vsel %vm327, %v1050, 0
        %1053 = vmatprep.subr.mxu0 0.0
        %1054 = vmatpush1.msra.mxu0 %v409
        %1055 = vmatprep.subr.mxu0 0.0
        %1056 = vmatpush1.msra.mxu0 %v410
        %1057 = vmatprep.subr.mxu0 0.0
        %1058 = vmatpush1.msra.mxu0 %v411
        %1059 = vmatprep.subr.mxu0 0.0
        %1060 = vmatpush1.msra.mxu0 %v412
        %1061 = vmatprep.subr.mxu0 0.0
        %1062 = vmatpush1.msra.mxu0 0.0
        %1063 = vmatprep.subr.mxu0 0.0
        %1064 = vmatpush1.msra.mxu0 0.0
        %1065 = vmatprep.subr.mxu0 0.0
        %1066 = vmatpush1.msra.mxu0 0.0
        %1067 = vmatprep.subr.mxu0 0.0
        %1068 = vmatpush1.msra.mxu0 0.0
        %1069 = vmatprep.subr.mxu0 0.0
        %1070 = vmatpush1.msra.mxu0 0.0
        %1071 = vmatprep.subr.mxu0 0.0
        %1072 = vmatpush1.msra.mxu0 0.0
        %1073 = vmatprep.subr.mxu0 0.0
        %1074 = vmatpush1.msra.mxu0 0.0
        %1075 = vmatprep.subr.mxu0 0.0
        %1076 = vmatpush1.msra.mxu0 0.0
        %1077 = vmatprep.subr.mxu0 0.0
        %1078 = vmatpush1.msra.mxu0 0.0
        %1079 = vmatprep.subr.mxu0 0.0
        %1080 = vmatpush1.msra.mxu0 0.0
        %1081 = vmatprep.subr.mxu0 0.0
        %1082 = vmatpush1.msra.mxu0 0.0
        %1083 = vmatprep.subr.mxu0 0.0
        %1084 = vmatpush1.msra.mxu0 0.0
        %1085 = vmatprep.subr.mxu0 0.0
        %1086 = vmatpush1.msra.mxu0 0.0
        %1087 = vmatprep.subr.mxu0 0.0
        %1088 = vmatpush1.msra.mxu0 0.0
        %1089 = vmatprep.subr.mxu0 0.0
        %1090 = vmatpush1.msra.mxu0 0.0
        %1091 = vmatprep.subr.mxu0 0.0
        %1092 = vmatpush1.msra.mxu0 0.0
        %1093 = vmatprep.subr.mxu0 0.0
        %1094 = vmatpush1.msra.mxu0 0.0
        %1095 = vmatprep.subr.mxu0 0.0
        %1096 = vmatpush1.msra.mxu0 0.0
        %1097 = vmatprep.subr.mxu0 0.0
        %1098 = vmatpush1.msra.mxu0 0.0
        %1099 = vmatprep.subr.mxu0 0.0
        %1100 = vmatpush1.msra.mxu0 0.0
        %1101 = vmatprep.subr.mxu0 0.0
        %1102 = vmatpush1.msra.mxu0 0.0
        %1103 = vmatprep.subr.mxu0 0.0
        %1104 = vmatpush1.msra.mxu0 0.0
        %1105 = vmatprep.subr.mxu0 0.0
        %1106 = vmatpush1.msra.mxu0 0.0
        %1107 = vmatprep.subr.mxu0 0.0
        %1108 = vmatpush1.msra.mxu0 0.0
        %1109 = vmatprep.subr.mxu0 0.0
        %1110 = vmatpush1.msra.mxu0 0.0
        %1111 = vmatprep.subr.mxu0 0.0
        %1112 = vmatpush1.msra.mxu0 0.0
        %1113 = vmatprep.subr.mxu0 0.0
        %1114 = vmatpush1.msra.mxu0 0.0
        %1115 = vmatprep.subr.mxu0 0.0
        %1116 = vmatpush1.msra.mxu0 0.0
        %1117 = vmatprep.mubr.f32.mxu0 0.0
        %1118 = vmatmul.mubr.f32.gmra.mrb[0].mxu0 %v1051
        %v1119 = vpop.f32.mrb[0].mxu0
        %v1120 = vadd.f32 0.0, %v1119
        %v1121 = vpop.f32.mrb[0].mxu0
        %1122 = vdwg.mxu0
        %v1124 = vrot.slane %v1120, 4
        %v1126 = vadd.f32 %v406, %v1124
        %v1127 = vxor.u32 %v1126, 2147483648
        %v1128 = vmul.f32 %v1127, 1.442695
        %v1129 = vpow.pop %v1128
        %v1130 = vadd.f32 %v1129, 1.0
        %v1131 = vrcp.pop %v1130
        %v1132 = vmul.f32 1.0, %v1131
        %v1133 = vmul.f32 %v1132, 2.0
        %v1134 = vsub.f32 %v1133, 1.0
        %v1136 = vrot.slane %v1040, 6
        %v1138 = vmul.f32 %v1132, %v1136
        %1140 = vrot.lane.b32.xlu0 %v1134, 64
        %v1141 = vpop.permute.xlu0 %1140
        %v1143 = vmul.f32 %v1132, %v1141
        %1145 = vrot.lane.b32.xlu0 %v1143, 32
        %v1146 = vpop.permute.xlu0 %1145
        %v1148 = vadd.f32 %v1138, %v1146
        %v1149 = vtanh.pop %v1148
        %1151 = vrot.lane.b32.xlu0 %v1149, 64
        %v1152 = vpop.permute.xlu0 %1151
        %v1154 = vmul.f32 %v1132, %v1152
        %v1156 = vrot.slane %v1154, 4
        %1157 = vrot.lane.b32.xlu0 %v1156, 32
        %v1158 = vpop.permute.xlu0 %1157
        %v1159 = vsel %vm327, %v1158, 0
        %1161 = vmatprep.subr.mxu0 0.0
        %1162 = vmatpush1.msra.mxu0 %v409
        %1163 = vmatprep.subr.mxu0 0.0
        %1164 = vmatpush1.msra.mxu0 %v410
        %1165 = vmatprep.subr.mxu0 0.0
        %1166 = vmatpush1.msra.mxu0 %v411
        %1167 = vmatprep.subr.mxu0 0.0
        %1168 = vmatpush1.msra.mxu0 %v412
        %1169 = vmatprep.subr.mxu0 0.0
        %1170 = vmatpush1.msra.mxu0 0.0
        %1171 = vmatprep.subr.mxu0 0.0
        %1172 = vmatpush1.msra.mxu0 0.0
        %1173 = vmatprep.subr.mxu0 0.0
        %1174 = vmatpush1.msra.mxu0 0.0
        %1175 = vmatprep.subr.mxu0 0.0
        %1176 = vmatpush1.msra.mxu0 0.0
        %1177 = vmatprep.subr.mxu0 0.0
        %1178 = vmatpush1.msra.mxu0 0.0
        %1179 = vmatprep.subr.mxu0 0.0
        %1180 = vmatpush1.msra.mxu0 0.0
        %1181 = vmatprep.subr.mxu0 0.0
        %1182 = vmatpush1.msra.mxu0 0.0
        %1183 = vmatprep.subr.mxu0 0.0
        %1184 = vmatpush1.msra.mxu0 0.0
        %1185 = vmatprep.subr.mxu0 0.0
        %1186 = vmatpush1.msra.mxu0 0.0
        %1187 = vmatprep.subr.mxu0 0.0
        %1188 = vmatpush1.msra.mxu0 0.0
        %1189 = vmatprep.subr.mxu0 0.0
        %1190 = vmatpush1.msra.mxu0 0.0
        %1191 = vmatprep.subr.mxu0 0.0
        %1192 = vmatpush1.msra.mxu0 0.0
        %1193 = vmatprep.subr.mxu0 0.0
        %1194 = vmatpush1.msra.mxu0 0.0
        %1195 = vmatprep.subr.mxu0 0.0
        %1196 = vmatpush1.msra.mxu0 0.0
        %1197 = vmatprep.subr.mxu0 0.0
        %1198 = vmatpush1.msra.mxu0 0.0
        %1199 = vmatprep.subr.mxu0 0.0
        %1200 = vmatpush1.msra.mxu0 0.0
        %1201 = vmatprep.subr.mxu0 0.0
        %1202 = vmatpush1.msra.mxu0 0.0
        %1203 = vmatprep.subr.mxu0 0.0
        %1204 = vmatpush1.msra.mxu0 0.0
        %1205 = vmatprep.subr.mxu0 0.0
        %1206 = vmatpush1.msra.mxu0 0.0
        %1207 = vmatprep.subr.mxu0 0.0
        %1208 = vmatpush1.msra.mxu0 0.0
        %1209 = vmatprep.subr.mxu0 0.0
        %1210 = vmatpush1.msra.mxu0 0.0
        %1211 = vmatprep.subr.mxu0 0.0
        %1212 = vmatpush1.msra.mxu0 0.0
        %1213 = vmatprep.subr.mxu0 0.0
        %1214 = vmatpush1.msra.mxu0 0.0
        %1215 = vmatprep.subr.mxu0 0.0
        %1216 = vmatpush1.msra.mxu0 0.0
        %1217 = vmatprep.subr.mxu0 0.0
        %1218 = vmatpush1.msra.mxu0 0.0
        %1219 = vmatprep.subr.mxu0 0.0
        %1220 = vmatpush1.msra.mxu0 0.0
        %1221 = vmatprep.subr.mxu0 0.0
        %1222 = vmatpush1.msra.mxu0 0.0
        %1223 = vmatprep.subr.mxu0 0.0
        %1224 = vmatpush1.msra.mxu0 0.0
        %1225 = vmatprep.mubr.f32.mxu0 0.0
        %1226 = vmatmul.mubr.f32.gmra.mrb[0].mxu0 %v1159
        %v1227 = vpop.f32.mrb[0].mxu0
        %v1228 = vadd.f32 0.0, %v1227
        %v1229 = vpop.f32.mrb[0].mxu0
        %1230 = vdwg.mxu0
        %v1232 = vrot.slane %v1228, 2
        %v1234 = vadd.f32 %v406, %v1232
        %v1235 = vxor.u32 %v1234, 2147483648
        %v1236 = vmul.f32 %v1235, 1.442695
        %v1237 = vpow.pop %v1236
        %v1238 = vadd.f32 %v1237, 1.0
        %v1239 = vrcp.pop %v1238
        %v1240 = vmul.f32 1.0, %v1239
        %v1241 = vmul.f32 %v1240, 2.0
        %v1242 = vsub.f32 %v1241, 1.0
        %v1244 = vrot.slane %v1148, 6
        %v1246 = vmul.f32 %v1240, %v1244
        %1248 = vrot.lane.b32.xlu0 %v1242, 64
        %v1249 = vpop.permute.xlu0 %1248
        %v1251 = vmul.f32 %v1240, %v1249
        %1253 = vrot.lane.b32.xlu0 %v1251, 32
        %v1254 = vpop.permute.xlu0 %1253
        %v1256 = vadd.f32 %v1246, %v1254
        %v1257 = vtanh.pop %v1256
        %1259 = vrot.lane.b32.xlu0 %v1257, 64
        %v1260 = vpop.permute.xlu0 %1259
        %v1262 = vmul.f32 %v1240, %v1260
        %vm1263 = vcmask 1041408
        %v1264 = vsel %vm1263, %v511, %v618
        %vm1265 = vcmask 1043456
        %v1266 = vsel %vm1265, %v1264, %v726
        %vm1267 = vcmask 1045504
        %v1268 = vsel %vm1267, %v1266, %v834
        %v1269 = vsel %vm1263, %v939, %v1046
        %v1270 = vsel %vm1265, %v1269, %v1154
        %v1271 = vsel %vm1267, %v1270, %v1262
        %v1272 = vld [vmem:[#allocation8] sm:$0xff]
        %v1273 = vld [vmem:[#allocation8 + $0x8] sm:$0xff]
        %v1274 = vld [vmem:[#allocation8 + $0x10] sm:$0xff]
        %v1275 = vld [vmem:[#allocation8 + $0x18] sm:$0xff]
        %v1276 = vld [vmem:[%s5] sm:$0x1]
        %v1278 = vlaneseq
        %v1279 = vshrl.u32 %v1278, 7
        %v1280 = vsub.s32 0, %v1279
        %v1281 = vrot.slane %v1276, %v1280
        %1285 = vrot.lane.b32.xlu0 %v1268, 32
        %v1286 = vpop.permute.xlu0 %1285
        %1287 = vrot.lane.b32.xlu0 %v1271, 32
        %v1288 = vpop.permute.xlu0 %1287
        %v1289 = vsel %vm327, %v1286, 0
        %v1291 = vsel %vm327, %v1288, 0
        %1293 = vmatprep.subr.mxu0 0.0
        %1294 = vmatpush1.msra.mxu0 %v1272
        %1295 = vmatprep.subr.mxu0 0.0
        %1296 = vmatpush1.msra.mxu0 %v1273
        %1297 = vmatprep.subr.mxu0 0.0
        %1298 = vmatpush1.msra.mxu0 %v1274
        %1299 = vmatprep.subr.mxu0 0.0
        %1300 = vmatpush1.msra.mxu0 %v1275
        %1301 = vmatprep.subr.mxu0 0.0
        %1302 = vmatpush1.msra.mxu0 0.0
        %1303 = vmatprep.subr.mxu0 0.0
        %1304 = vmatpush1.msra.mxu0 0.0
        %1305 = vmatprep.subr.mxu0 0.0
        %1306 = vmatpush1.msra.mxu0 0.0
        %1307 = vmatprep.subr.mxu0 0.0
        %1308 = vmatpush1.msra.mxu0 0.0
        %1309 = vmatprep.subr.mxu0 0.0
        %1310 = vmatpush1.msra.mxu0 0.0
        %1311 = vmatprep.subr.mxu0 0.0
        %1312 = vmatpush1.msra.mxu0 0.0
        %1313 = vmatprep.subr.mxu0 0.0
        %1314 = vmatpush1.msra.mxu0 0.0
        %1315 = vmatprep.subr.mxu0 0.0
        %1316 = vmatpush1.msra.mxu0 0.0
        %1317 = vmatprep.subr.mxu0 0.0
        %1318 = vmatpush1.msra.mxu0 0.0
        %1319 = vmatprep.subr.mxu0 0.0
        %1320 = vmatpush1.msra.mxu0 0.0
        %1321 = vmatprep.subr.mxu0 0.0
        %1322 = vmatpush1.msra.mxu0 0.0
        %1323 = vmatprep.subr.mxu0 0.0
        %1324 = vmatpush1.msra.mxu0 0.0
        %1325 = vmatprep.subr.mxu0 0.0
        %1326 = vmatpush1.msra.mxu0 0.0
        %1327 = vmatprep.subr.mxu0 0.0
        %1328 = vmatpush1.msra.mxu0 0.0
        %1329 = vmatprep.subr.mxu0 0.0
        %1330 = vmatpush1.msra.mxu0 0.0
        %1331 = vmatprep.subr.mxu0 0.0
        %1332 = vmatpush1.msra.mxu0 0.0
        %1333 = vmatprep.subr.mxu0 0.0
        %1334 = vmatpush1.msra.mxu0 0.0
        %1335 = vmatprep.subr.mxu0 0.0
        %1336 = vmatpush1.msra.mxu0 0.0
        %1337 = vmatprep.subr.mxu0 0.0
        %1338 = vmatpush1.msra.mxu0 0.0
        %1339 = vmatprep.subr.mxu0 0.0
        %1340 = vmatpush1.msra.mxu0 0.0
        %1341 = vmatprep.subr.mxu0 0.0
        %1342 = vmatpush1.msra.mxu0 0.0
        %1343 = vmatprep.subr.mxu0 0.0
        %1344 = vmatpush1.msra.mxu0 0.0
        %1345 = vmatprep.subr.mxu0 0.0
        %1346 = vmatpush1.msra.mxu0 0.0
        %1347 = vmatprep.subr.mxu0 0.0
        %1348 = vmatpush1.msra.mxu0 0.0
        %1349 = vmatprep.subr.mxu0 0.0
        %1350 = vmatpush1.msra.mxu0 0.0
        %1351 = vmatprep.subr.mxu0 0.0
        %1352 = vmatpush1.msra.mxu0 0.0
        %1353 = vmatprep.subr.mxu0 0.0
        %1354 = vmatpush1.msra.mxu0 0.0
        %1355 = vmatprep.subr.mxu0 0.0
        %1356 = vmatpush1.msra.mxu0 0.0
        %1357 = vmatprep.mubr.f32.mxu0 0.0
        %1358 = vmatmul.mubr.f32.gmra.mrb[0].mxu0 %v1289
        %v1359 = vpop.f32.mrb[0].mxu0
        %v1360 = vadd.f32 %v1281, %v1359
        %v1361 = vpop.f32.mrb[0].mxu0
        %1362 = vmatprep.mubr.f32.mxu0 0.0
        %1363 = vmatmul.mubr.f32.gmra.mrb[0].mxu0 %v1291
        %v1364 = vpop.f32.mrb[0].mxu0
        %v1365 = vadd.f32 %v1281, %v1364
        %v1366 = vpop.f32.mrb[0].mxu0
        %1367 = vdwg.mxu0
        %v1368 = vxor.u32 %v1360, 2147483648
        %v1369 = vxor.u32 %v1365, 2147483648
        %v1370 = vmul.f32 %v1368, 1.442695
        %v1371 = vpow.pop %v1370
        %v1372 = vmul.f32 %v1369, 1.442695
        %v1373 = vpow.pop %v1372
        %v1374 = vadd.f32 %v1371, 1.0
        %v1375 = vadd.f32 %v1373, 1.0
        %v1376 = vrcp.pop %v1374
        %v1377 = vmul.f32 1.0, %v1376
        %v1378 = vrcp.pop %v1375
        %v1379 = vmul.f32 1.0, %v1378
        %1380 = vst [vmem:[%s313] sm:$0xff] %v1377
        %1381 = vst [vmem:[%s313 + $0x8] sm:$0xff] %v1379
        %s1382 = sand.u32 %s164, 1
        %s1383 = scalar_lea.sflag [#allocation4], %s1382
        %s1384 = sand.u32 %s164, 1
        %s1385 = smul.addr %s1384, 16
        %s1386 = scalar_lea.vmem [#allocation10], %s1385
        // Predicated region
        $region61: #{tpu_custom_call.1} parent=43 // pred_check
          %p1387 = pneg %p174
        $region62: #{tpu_custom_call.1} parent=43 // pred_check_branch
          %1389 = sbr.rel (%p1387) target = $region64
        $region63: #{tpu_custom_call.1} parent=43 // pred_region
          %s1391 = ssub.s32 256, 256
          %1392 = vsyncadd %s1383, %s1391
          %s1393 = smul.addr %s25, 2
          %s1394 = smul.addr %s1393, 128
          %s1395 = scalar_lea.hbm %s6, %s1394
          %s1396 = sshll.u32 %s1386, 4
          %s1397 = int_to_ptr.vmem [resolvable:$true] %s1396
          %1402 = dma.vmem_to_hbm [thread:$0]  %s1397, 256, %s1395, %s1383, 128, 128, 8
        $region64: #{tpu_custom_call.1} parent=43 // pred_fallthru
          _
      $region44: #{tpu_custom_call.1} parent=5 // pred_fallthru
        _
      %p1403 = scmp.le.s32.totalorder 2, %s20
      // Predicated region
      $region65: #{tpu_custom_call.1} parent=5 // pred_check
        %p1404 = pneg %p1403
      $region66: #{tpu_custom_call.1} parent=5 // pred_check_branch
        %1406 = sbr.rel (%p1404) target = $region68
      $region67: #{tpu_custom_call.1} parent=5 // pred_region
        %s1407 = ssub.s32 %s20, 2
        // Predicated region
        $region69: #{tpu_custom_call.1} parent=67 // pred_check
          %p1408 = pneg %p180
        $region70: #{tpu_custom_call.1} parent=67 // pred_check_branch
          %1410 = sbr.rel (%p1408) target = $region72
        $region71: #{tpu_custom_call.1} parent=67 // pred_region
          %s1411 = sand.u32 %s165, 1
          %s1412 = scalar_lea.sflag [#allocation4], %s1411
          %s1413 = sand.u32 %s165, 1
          %s1414 = smul.addr %s1413, 16
          %s1415 = scalar_lea.vmem [#allocation10], %s1414
          %1416 = dma.done %s1412, 256
        $region72: #{tpu_custom_call.1} parent=67 // pred_fallthru
          _
      $region68: #{tpu_custom_call.1} parent=5 // pred_fallthru
        _
    $region6: #{tpu_custom_call.1} parent=1 // loop_footer
      %s24 = sadd.s32 1, %s20
    $region7: #{tpu_custom_call.1} parent=1 // loop_footer_branch
      %19 = sbr.rel target = $region3
    $region8: #{tpu_custom_call.1} parent=1 // loop_exit
      _
    %1417 = vsyncpa [#allocation3], 1
    %s1418 = scalar_lea.sflag [#allocation3], 1
    %1419 = vsyncpa %s1418, 1
    %1420 = vsyncpa [#allocation6], 1
    %1421 = vsyncpa [#allocation9], 1
    %1422 = vsyncpa [#allocation4], 1
    %s1423 = scalar_lea.sflag [#allocation4], 1
    %1424 = vsyncpa %s1423, 1

</llo_original>
